<compile_context>
chip_gen: v5e
topology: v5e:2x2
jax: 0.10.0
libtpu: 0.0.40
codegen_flags: <defaults>
</compile_context>

<pallas_src>
import jax
import jax.numpy as jnp
from jax.experimental import pallas as pl
from jax.experimental.pallas import tpu as pltpu


def make_resblock_kernel(H, W):
    L = H * W
    PAD = W + 1                    # zero halo (one row + one pixel) per side
    P = L + 2 * PAD                # padded flattened spatial length

    def conv3x3(src_ref, w_ref, mask_l, mask_r, cout):
        """3x3 SAME conv on the zero-haloed flat layout.

        src_ref : (cin, P) VMEM scratch, zeros in [0, PAD) and [PAD+L, P).
        w_ref   : (3, 3, cout, cin) weights (BN scale already folded in).
        Each tap is a contiguous lane-slice of src_ref; row halos are covered
        by the zero halo, column halos by mask_l / mask_r.
        """
        acc = jnp.zeros((cout, L), jnp.float32)
        for dy in range(3):
            for dx in range(3):
                a, b = dy - 1, dx - 1
                start = PAD + a * W + b
                patch = src_ref[:, start:start + L]          # (cin, L)
                if b == -1:
                    patch = jnp.where(mask_l, patch, 0)
                elif b == 1:
                    patch = jnp.where(mask_r, patch, 0)
                # flat (cout, cin) @ (cin, H*W) -> lane-dense (cout, H*W)
                acc = acc + jnp.dot(w_ref[dy, dx], patch,
                                    preferred_element_type=jnp.float32)
        return acc

    def kernel(col_ref, x_ref, w1_ref, b1_ref, w2_ref, b2_ref, out_ref,
               xp_ref, y1p_ref):
        cin = x_ref.shape[1]
        cout = out_ref.shape[1]

        col = col_ref[...]                                   # (1, L) int32
        mask_l = col >= 1            # taps that look one column to the left
        mask_r = col < (W - 1)       # taps that look one column to the right

        x = x_ref[0]                                         # (cin, L)

        # stage x into the zero-haloed flat scratch (only halos are zeroed)
        xp_ref[:, :PAD] = jnp.zeros((cin, PAD), xp_ref.dtype)
        xp_ref[:, PAD + L:] = jnp.zeros((cin, PAD), xp_ref.dtype)
        xp_ref[:, PAD:PAD + L] = x

        # ---- conv1 (BN1 scale folded into w1) + bias + ReLU ----
        acc1 = conv3x3(xp_ref, w1_ref, mask_l, mask_r, cout)
        y1 = jnp.maximum(acc1 + b1_ref[...], 0.0)            # (cout, L) f32

        # stage y1 the same way for conv2
        y1p_ref[:, :PAD] = jnp.zeros((cout, PAD), y1p_ref.dtype)
        y1p_ref[:, PAD + L:] = jnp.zeros((cout, PAD), y1p_ref.dtype)
        y1p_ref[:, PAD:PAD + L] = y1.astype(y1p_ref.dtype)

        # ---- conv2 (BN2 scale folded into w2) + bias ----
        acc2 = conv3x3(y1p_ref, w2_ref, mask_l, mask_r, cout)
        y2 = acc2 + b2_ref[...]

        # ---- residual add + ReLU; lane-dense (last dim = H*W) store ----
        out = jnp.maximum(y2 + x.astype(jnp.float32), 0.0)
        out_ref[0] = out.astype(out_ref.dtype)

    return kernel


def residual_block(x_nchw, w1, s1, b1, w2, s2, b2):
    """x: (N, C, H, W) NCHW; w: (3,3,Cin,Cout) HWIO; s/b: (1,1,Cout) folded BN."""
    N, C, H, W = x_nchw.shape
    Cout = w1.shape[-1]
    assert C == Cout, "no downsample path -> residual requires Cin == Cout"
    L = H * W
    P = L + 2 * (W + 1)
    dt = x_nchw.dtype

    # Fold BN scale into the conv weights (exact for inference BN) and arrange
    # as (3, 3, Cout, Cin) so each tap is a ready-to-use matmul LHS.
    w1f = jnp.transpose(w1 * s1.reshape(1, 1, 1, Cout), (0, 1, 3, 2)).astype(dt)
    w2f = jnp.transpose(w2 * s2.reshape(1, 1, 1, Cout), (0, 1, 3, 2)).astype(dt)
    b1c = b1.reshape(Cout, 1).astype(jnp.float32)
    b2c = b2.reshape(Cout, 1).astype(jnp.float32)

    # Channels-first, spatially-flattened view (free reshape of NCHW).
    x_flat = x_nchw.reshape(N, C, L)
    col_ids = (jnp.arange(L, dtype=jnp.int32) % W).reshape(1, L)

    out_flat = pl.pallas_call(
        make_resblock_kernel(H, W),
        out_shape=jax.ShapeDtypeStruct((N, Cout, L), dt),
        grid_spec=pltpu.PrefetchScalarGridSpec(
            num_scalar_prefetch=0,
            grid=(N,),
            in_specs=[
                pl.BlockSpec((1, L), lambda n: (0, 0)),            # col ids
                pl.BlockSpec((1, C, L), lambda n: (n, 0, 0)),      # x
                pl.BlockSpec((3, 3, Cout, C), lambda n: (0, 0, 0, 0)),
                pl.BlockSpec((Cout, 1), lambda n: (0, 0)),
                pl.BlockSpec((3, 3, Cout, Cout), lambda n: (0, 0, 0, 0)),
                pl.BlockSpec((Cout, 1), lambda n: (0, 0)),
            ],
            out_specs=pl.BlockSpec((1, Cout, L), lambda n: (n, 0, 0)),
            scratch_shapes=[
                pltpu.VMEM((C, P), dt),       # zero-haloed x
                pltpu.VMEM((Cout, P), dt),    # zero-haloed y1
            ],
        ),
        compiler_params=pltpu.CompilerParams(
            dimension_semantics=("parallel",)),
    )(col_ids, x_flat, w1f, b1c, w2f, b2c)

    return out_flat.reshape(N, Cout, H, W)


def make_params(key, cin, cout, eps=1e-5):
    """Deterministic Conv2d(bias=True) + BatchNorm2d params, folded for inference."""
    k = jax.random.split(key, 6)
    w_oihw = 0.1 * jax.random.normal(k[0], (cout, cin, 3, 3), jnp.float32)
    cbias = 0.05 * jax.random.normal(k[1], (cout,), jnp.float32)
    gamma = 1.0 + 0.1 * jax.random.normal(k[2], (cout,), jnp.float32)
    beta = 0.1 * jax.random.normal(k[3], (cout,), jnp.float32)
    rmean = 0.05 * jax.random.normal(k[4], (cout,), jnp.float32)
    rvar = 1.0 + 0.2 * jax.random.uniform(k[5], (cout,), jnp.float32)
    w_hwio = jnp.transpose(w_oihw, (2, 3, 1, 0))                 # (3,3,cin,cout)
    scale = gamma / jnp.sqrt(rvar + eps)
    bias = (cbias - rmean) * scale + beta
    return w_hwio, scale.reshape(1, 1, cout), bias.reshape(1, 1, cout)


if __name__ == "__main__":
    key = jax.random.PRNGKey(0)
    kx, k1, k2 = jax.random.split(key, 3)

    N, C, H, W = 2, 4, 16, 16                # PyTorch-style input: (N, C, H, W)
    x = jax.random.normal(kx, (N, C, H, W), jnp.float32)

    w1, s1, b1 = make_params(k1, C, C)
    w2, s2, b2 = make_params(k2, C, C)

    out = residual_block(x, w1, s1, b1, w2, s2, b2)
    out = jax.block_until_ready(out)
    assert out.shape == (N, C, H, W)

    # pure-JAX reference for validation (BN scale/bias applied un-folded)
    def conv_ref(x_, w_):
        return jax.lax.conv_general_dilated(
            x_, w_, (1, 1), "SAME",
            dimension_numbers=("NCHW", "HWIO", "NCHW"))

    s1n, b1n = s1.reshape(1, C, 1, 1), b1.reshape(1, C, 1, 1)
    s2n, b2n = s2.reshape(1, C, 1, 1), b2.reshape(1, C, 1, 1)
    ref = jnp.maximum(conv_ref(x, w1) * s1n + b1n, 0.0)
    ref = conv_ref(ref, w2) * s2n + b2n
    ref = jnp.maximum(ref + x, 0.0)

    err = float(jnp.max(jnp.abs(out - ref)))
    assert jnp.allclose(out, ref, atol=1e-2, rtol=1e-2), err

    print("KERNEL_OK")
</pallas_src>

<mosaic_0001>
module attributes {stable_mosaic.version = 11 : i64} {
  func.func @kernel(%arg0: i32, %arg1: memref<1x256xi32, #tpu.memory_space<vmem>>, %arg2: memref<1x4x256xf32, #tpu.memory_space<vmem>>, %arg3: memref<3x3x4x4xf32, #tpu.memory_space<vmem>>, %arg4: memref<4x1xf32, #tpu.memory_space<vmem>>, %arg5: memref<3x3x4x4xf32, #tpu.memory_space<vmem>>, %arg6: memref<4x1xf32, #tpu.memory_space<vmem>>, %arg7: memref<1x4x256xf32, #tpu.memory_space<vmem>>, %arg8: memref<4x290xf32, #tpu.memory_space<vmem>>, %arg9: memref<4x290xf32, #tpu.memory_space<vmem>>) attributes {dimension_semantics = [#tpu.dimension_semantics<parallel>], iteration_bounds = array<i64: 2>, scalar_prefetch = 0 : i64, scratch_operands = 2 : i64, tpu.core_type = #tpu.core_type<tc>, window_params = [{pipeline_mode = #tpu.pipeline_mode<synchronous>, transform_indices = @transform_0, window_bounds = array<i64: 1, 256>}, {transform_indices = @transform_1, window_bounds = array<i64: 1, 4, 256>}, {pipeline_mode = #tpu.pipeline_mode<synchronous>, transform_indices = @transform_2, window_bounds = array<i64: 3, 3, 4, 4>}, {pipeline_mode = #tpu.pipeline_mode<synchronous>, transform_indices = @transform_3, window_bounds = array<i64: 4, 1>}, {pipeline_mode = #tpu.pipeline_mode<synchronous>, transform_indices = @transform_4, window_bounds = array<i64: 3, 3, 4, 4>}, {pipeline_mode = #tpu.pipeline_mode<synchronous>, transform_indices = @transform_5, window_bounds = array<i64: 4, 1>}, {transform_indices = @transform_6, window_bounds = array<i64: 1, 4, 256>}]} {
    %c0 = arith.constant 0 : index
    %c0_0 = arith.constant 0 : index
    %0 = vector.load %arg1[%c0, %c0_0] : memref<1x256xi32, #tpu.memory_space<vmem>>, vector<1x256xi32>
    %c1_i32 = arith.constant 1 : i32
    %1 = vector.broadcast %c1_i32 : i32 to vector<1x256xi32>
    %2 = arith.cmpi sge, %0, %1 : vector<1x256xi32>
    %c15_i32 = arith.constant 15 : i32
    %3 = vector.broadcast %c15_i32 : i32 to vector<1x256xi32>
    %4 = arith.cmpi slt, %0, %3 : vector<1x256xi32>
    %c0_1 = arith.constant 0 : index
    %c0_2 = arith.constant 0 : index
    %c0_3 = arith.constant 0 : index
    %5 = vector.load %arg2[%c0_1, %c0_2, %c0_3] : memref<1x4x256xf32, #tpu.memory_space<vmem>>, vector<1x4x256xf32>
    %6 = vector.shape_cast %5 : vector<1x4x256xf32> to vector<4x256xf32>
    %cst = arith.constant 0.000000e+00 : f32
    %7 = vector.broadcast %cst : f32 to vector<4x17xf32>
    %c0_4 = arith.constant 0 : index
    %c0_5 = arith.constant 0 : index
    %8 = vector.load %arg8[%c0_4, %c0_5] : memref<4x290xf32, #tpu.memory_space<vmem>>, vector<4x17xf32>
    tpu.vector_store %arg8[%c0_4, %c0_5], %7 {strides = array<i32>} : memref<4x290xf32, #tpu.memory_space<vmem>>, vector<4x17xf32>,
    %cst_6 = arith.constant 0.000000e+00 : f32
    %9 = vector.broadcast %cst_6 : f32 to vector<4x17xf32>
    %c0_7 = arith.constant 0 : index
    %c273 = arith.constant 273 : index
    %10 = vector.load %arg8[%c0_7, %c273] : memref<4x290xf32, #tpu.memory_space<vmem>>, vector<4x17xf32>
    tpu.vector_store %arg8[%c0_7, %c273], %9 {strides = array<i32>} : memref<4x290xf32, #tpu.memory_space<vmem>>, vector<4x17xf32>,
    %c0_8 = arith.constant 0 : index
    %c17 = arith.constant 17 : index
    %11 = vector.load %arg8[%c0_8, %c17] : memref<4x290xf32, #tpu.memory_space<vmem>>, vector<4x256xf32>
    tpu.vector_store %arg8[%c0_8, %c17], %6 {strides = array<i32>} : memref<4x290xf32, #tpu.memory_space<vmem>>, vector<4x256xf32>,
    %cst_9 = arith.constant 0.000000e+00 : f32
    %12 = vector.broadcast %cst_9 : f32 to vector<4x256xf32>
    %c0_10 = arith.constant 0 : index
    %c0_11 = arith.constant 0 : index
    %13 = vector.load %arg8[%c0_10, %c0_11] : memref<4x290xf32, #tpu.memory_space<vmem>>, vector<4x256xf32>
    %c0_i32 = arith.constant 0 : i32
    %14 = arith.sitofp %c0_i32 : i32 to f32
    %15 = vector.shape_cast %2 : vector<1x256xi1> to vector<1x256xi1>
    %16 = vector.broadcast %15 : vector<1x256xi1> to vector<4x256xi1>
    %17 = vector.broadcast %14 : f32 to vector<4x256xf32>
    %18 = arith.select %16, %13, %17 : vector<4x256xi1>, vector<4x256xf32>
    %c0_12 = arith.constant 0 : index
    %c0_13 = arith.constant 0 : index
    %c0_14 = arith.constant 0 : index
    %c0_15 = arith.constant 0 : index
    %19 = vector.load %arg3[%c0_12, %c0_13, %c0_14, %c0_15] : memref<3x3x4x4xf32, #tpu.memory_space<vmem>>, vector<1x1x4x4xf32>
    %20 = vector.shape_cast %19 : vector<1x1x4x4xf32> to vector<4x4xf32>
    %cst_16 = arith.constant dense<0.000000e+00> : vector<4x256xf32>
    %21 = tpu.matmul %20, %18, %cst_16 {dimension_numbers = #tpu.dot_dimension_numbers<[1], [0], [0], [1], [0, 0, 1, 1], [], []>} : vector<4x4xf32>, vector<4x256xf32>, vector<4x256xf32> -> vector<4x256xf32>
    %22 = arith.addf %12, %21 : vector<4x256xf32>
    %c0_17 = arith.constant 0 : index
    %c1 = arith.constant 1 : index
    %23 = vector.load %arg8[%c0_17, %c1] : memref<4x290xf32, #tpu.memory_space<vmem>>, vector<4x256xf32>
    %c0_18 = arith.constant 0 : index
    %c1_19 = arith.constant 1 : index
    %c0_20 = arith.constant 0 : index
    %c0_21 = arith.constant 0 : index
    %24 = vector.load %arg3[%c0_18, %c1_19, %c0_20, %c0_21] : memref<3x3x4x4xf32, #tpu.memory_space<vmem>>, vector<1x1x4x4xf32>
    %25 = vector.shape_cast %24 : vector<1x1x4x4xf32> to vector<4x4xf32>
    %cst_22 = arith.constant dense<0.000000e+00> : vector<4x256xf32>
    %26 = tpu.matmul %25, %23, %cst_22 {dimension_numbers = #tpu.dot_dimension_numbers<[1], [0], [0], [1], [0, 0, 1, 1], [], []>} : vector<4x4xf32>, vector<4x256xf32>, vector<4x256xf32> -> vector<4x256xf32>
    %27 = arith.addf %22, %26 : vector<4x256xf32>
    %c0_23 = arith.constant 0 : index
    %c2 = arith.constant 2 : index
    %28 = vector.load %arg8[%c0_23, %c2] : memref<4x290xf32, #tpu.memory_space<vmem>>, vector<4x256xf32>
    %c0_i32_24 = arith.constant 0 : i32
    %29 = arith.sitofp %c0_i32_24 : i32 to f32
    %30 = vector.shape_cast %4 : vector<1x256xi1> to vector<1x256xi1>
    %31 = vector.broadcast %30 : vector<1x256xi1> to vector<4x256xi1>
    %32 = vector.broadcast %29 : f32 to vector<4x256xf32>
    %33 = arith.select %31, %28, %32 : vector<4x256xi1>, vector<4x256xf32>
    %c0_25 = arith.constant 0 : index
    %c2_26 = arith.constant 2 : index
    %c0_27 = arith.constant 0 : index
    %c0_28 = arith.constant 0 : index
    %34 = vector.load %arg3[%c0_25, %c2_26, %c0_27, %c0_28] : memref<3x3x4x4xf32, #tpu.memory_space<vmem>>, vector<1x1x4x4xf32>
    %35 = vector.shape_cast %34 : vector<1x1x4x4xf32> to vector<4x4xf32>
    %cst_29 = arith.constant dense<0.000000e+00> : vector<4x256xf32>
    %36 = tpu.matmul %35, %33, %cst_29 {dimension_numbers = #tpu.dot_dimension_numbers<[1], [0], [0], [1], [0, 0, 1, 1], [], []>} : vector<4x4xf32>, vector<4x256xf32>, vector<4x256xf32> -> vector<4x256xf32>
    %37 = arith.addf %27, %36 : vector<4x256xf32>
    %c0_30 = arith.constant 0 : index
    %c16 = arith.constant 16 : index
    %38 = vector.load %arg8[%c0_30, %c16] : memref<4x290xf32, #tpu.memory_space<vmem>>, vector<4x256xf32>
    %c0_i32_31 = arith.constant 0 : i32
    %39 = arith.sitofp %c0_i32_31 : i32 to f32
    %40 = vector.shape_cast %2 : vector<1x256xi1> to vector<1x256xi1>
    %41 = vector.broadcast %40 : vector<1x256xi1> to vector<4x256xi1>
    %42 = vector.broadcast %39 : f32 to vector<4x256xf32>
    %43 = arith.select %41, %38, %42 : vector<4x256xi1>, vector<4x256xf32>
    %c1_32 = arith.constant 1 : index
    %c0_33 = arith.constant 0 : index
    %c0_34 = arith.constant 0 : index
    %c0_35 = arith.constant 0 : index
    %44 = vector.load %arg3[%c1_32, %c0_33, %c0_34, %c0_35] : memref<3x3x4x4xf32, #tpu.memory_space<vmem>>, vector<1x1x4x4xf32>
    %45 = vector.shape_cast %44 : vector<1x1x4x4xf32> to vector<4x4xf32>
    %cst_36 = arith.constant dense<0.000000e+00> : vector<4x256xf32>
    %46 = tpu.matmul %45, %43, %cst_36 {dimension_numbers = #tpu.dot_dimension_numbers<[1], [0], [0], [1], [0, 0, 1, 1], [], []>} : vector<4x4xf32>, vector<4x256xf32>, vector<4x256xf32> -> vector<4x256xf32>
    %47 = arith.addf %37, %46 : vector<4x256xf32>
    %c0_37 = arith.constant 0 : index
    %c17_38 = arith.constant 17 : index
    %48 = vector.load %arg8[%c0_37, %c17_38] : memref<4x290xf32, #tpu.memory_space<vmem>>, vector<4x256xf32>
    %c1_39 = arith.constant 1 : index
    %c1_40 = arith.constant 1 : index
    %c0_41 = arith.constant 0 : index
    %c0_42 = arith.constant 0 : index
    %49 = vector.load %arg3[%c1_39, %c1_40, %c0_41, %c0_42] : memref<3x3x4x4xf32, #tpu.memory_space<vmem>>, vector<1x1x4x4xf32>
    %50 = vector.shape_cast %49 : vector<1x1x4x4xf32> to vector<4x4xf32>
    %cst_43 = arith.constant dense<0.000000e+00> : vector<4x256xf32>
    %51 = tpu.matmul %50, %48, %cst_43 {dimension_numbers = #tpu.dot_dimension_numbers<[1], [0], [0], [1], [0, 0, 1, 1], [], []>} : vector<4x4xf32>, vector<4x256xf32>, vector<4x256xf32> -> vector<4x256xf32>
    %52 = arith.addf %47, %51 : vector<4x256xf32>
    %c0_44 = arith.constant 0 : index
    %c18 = arith.constant 18 : index
    %53 = vector.load %arg8[%c0_44, %c18] : memref<4x290xf32, #tpu.memory_space<vmem>>, vector<4x256xf32>
    %c0_i32_45 = arith.constant 0 : i32
    %54 = arith.sitofp %c0_i32_45 : i32 to f32
    %55 = vector.shape_cast %4 : vector<1x256xi1> to vector<1x256xi1>
    %56 = vector.broadcast %55 : vector<1x256xi1> to vector<4x256xi1>
    %57 = vector.broadcast %54 : f32 to vector<4x256xf32>
    %58 = arith.select %56, %53, %57 : vector<4x256xi1>, vector<4x256xf32>
    %c1_46 = arith.constant 1 : index
    %c2_47 = arith.constant 2 : index
    %c0_48 = arith.constant 0 : index
    %c0_49 = arith.constant 0 : index
    %59 = vector.load %arg3[%c1_46, %c2_47, %c0_48, %c0_49] : memref<3x3x4x4xf32, #tpu.memory_space<vmem>>, vector<1x1x4x4xf32>
    %60 = vector.shape_cast %59 : vector<1x1x4x4xf32> to vector<4x4xf32>
    %cst_50 = arith.constant dense<0.000000e+00> : vector<4x256xf32>
    %61 = tpu.matmul %60, %58, %cst_50 {dimension_numbers = #tpu.dot_dimension_numbers<[1], [0], [0], [1], [0, 0, 1, 1], [], []>} : vector<4x4xf32>, vector<4x256xf32>, vector<4x256xf32> -> vector<4x256xf32>
    %62 = arith.addf %52, %61 : vector<4x256xf32>
    %c0_51 = arith.constant 0 : index
    %c32 = arith.constant 32 : index
    %63 = vector.load %arg8[%c0_51, %c32] : memref<4x290xf32, #tpu.memory_space<vmem>>, vector<4x256xf32>
    %c0_i32_52 = arith.constant 0 : i32
    %64 = arith.sitofp %c0_i32_52 : i32 to f32
    %65 = vector.shape_cast %2 : vector<1x256xi1> to vector<1x256xi1>
    %66 = vector.broadcast %65 : vector<1x256xi1> to vector<4x256xi1>
    %67 = vector.broadcast %64 : f32 to vector<4x256xf32>
    %68 = arith.select %66, %63, %67 : vector<4x256xi1>, vector<4x256xf32>
    %c2_53 = arith.constant 2 : index
    %c0_54 = arith.constant 0 : index
    %c0_55 = arith.constant 0 : index
    %c0_56 = arith.constant 0 : index
    %69 = vector.load %arg3[%c2_53, %c0_54, %c0_55, %c0_56] : memref<3x3x4x4xf32, #tpu.memory_space<vmem>>, vector<1x1x4x4xf32>
    %70 = vector.shape_cast %69 : vector<1x1x4x4xf32> to vector<4x4xf32>
    %cst_57 = arith.constant dense<0.000000e+00> : vector<4x256xf32>
    %71 = tpu.matmul %70, %68, %cst_57 {dimension_numbers = #tpu.dot_dimension_numbers<[1], [0], [0], [1], [0, 0, 1, 1], [], []>} : vector<4x4xf32>, vector<4x256xf32>, vector<4x256xf32> -> vector<4x256xf32>
    %72 = arith.addf %62, %71 : vector<4x256xf32>
    %c0_58 = arith.constant 0 : index
    %c33 = arith.constant 33 : index
    %73 = vector.load %arg8[%c0_58, %c33] : memref<4x290xf32, #tpu.memory_space<vmem>>, vector<4x256xf32>
    %c2_59 = arith.constant 2 : index
    %c1_60 = arith.constant 1 : index
    %c0_61 = arith.constant 0 : index
    %c0_62 = arith.constant 0 : index
    %74 = vector.load %arg3[%c2_59, %c1_60, %c0_61, %c0_62] : memref<3x3x4x4xf32, #tpu.memory_space<vmem>>, vector<1x1x4x4xf32>
    %75 = vector.shape_cast %74 : vector<1x1x4x4xf32> to vector<4x4xf32>
    %cst_63 = arith.constant dense<0.000000e+00> : vector<4x256xf32>
    %76 = tpu.matmul %75, %73, %cst_63 {dimension_numbers = #tpu.dot_dimension_numbers<[1], [0], [0], [1], [0, 0, 1, 1], [], []>} : vector<4x4xf32>, vector<4x256xf32>, vector<4x256xf32> -> vector<4x256xf32>
    %77 = arith.addf %72, %76 : vector<4x256xf32>
    %c0_64 = arith.constant 0 : index
    %c34 = arith.constant 34 : index
    %78 = vector.load %arg8[%c0_64, %c34] : memref<4x290xf32, #tpu.memory_space<vmem>>, vector<4x256xf32>
    %c0_i32_65 = arith.constant 0 : i32
    %79 = arith.sitofp %c0_i32_65 : i32 to f32
    %80 = vector.shape_cast %4 : vector<1x256xi1> to vector<1x256xi1>
    %81 = vector.broadcast %80 : vector<1x256xi1> to vector<4x256xi1>
    %82 = vector.broadcast %79 : f32 to vector<4x256xf32>
    %83 = arith.select %81, %78, %82 : vector<4x256xi1>, vector<4x256xf32>
    %c2_66 = arith.constant 2 : index
    %c2_67 = arith.constant 2 : index
    %c0_68 = arith.constant 0 : index
    %c0_69 = arith.constant 0 : index
    %84 = vector.load %arg3[%c2_66, %c2_67, %c0_68, %c0_69] : memref<3x3x4x4xf32, #tpu.memory_space<vmem>>, vector<1x1x4x4xf32>
    %85 = vector.shape_cast %84 : vector<1x1x4x4xf32> to vector<4x4xf32>
    %cst_70 = arith.constant dense<0.000000e+00> : vector<4x256xf32>
    %86 = tpu.matmul %85, %83, %cst_70 {dimension_numbers = #tpu.dot_dimension_numbers<[1], [0], [0], [1], [0, 0, 1, 1], [], []>} : vector<4x4xf32>, vector<4x256xf32>, vector<4x256xf32> -> vector<4x256xf32>
    %87 = arith.addf %77, %86 : vector<4x256xf32>
    %c0_71 = arith.constant 0 : index
    %c0_72 = arith.constant 0 : index
    %88 = vector.load %arg4[%c0_71, %c0_72] : memref<4x1xf32, #tpu.memory_space<vmem>>, vector<4x1xf32>
    %89 = vector.broadcast %88 : vector<4x1xf32> to vector<4x256xf32>
    %90 = arith.addf %87, %89 : vector<4x256xf32>
    %cst_73 = arith.constant 0.000000e+00 : f32
    %91 = vector.broadcast %cst_73 : f32 to vector<4x256xf32>
    %92 = arith.maximumf %90, %91 : vector<4x256xf32>
    %cst_74 = arith.constant 0.000000e+00 : f32
    %93 = vector.broadcast %cst_74 : f32 to vector<4x17xf32>
    %c0_75 = arith.constant 0 : index
    %c0_76 = arith.constant 0 : index
    %94 = vector.load %arg9[%c0_75, %c0_76] : memref<4x290xf32, #tpu.memory_space<vmem>>, vector<4x17xf32>
    tpu.vector_store %arg9[%c0_75, %c0_76], %93 {strides = array<i32>} : memref<4x290xf32, #tpu.memory_space<vmem>>, vector<4x17xf32>,
    %cst_77 = arith.constant 0.000000e+00 : f32
    %95 = vector.broadcast %cst_77 : f32 to vector<4x17xf32>
    %c0_78 = arith.constant 0 : index
    %c273_79 = arith.constant 273 : index
    %96 = vector.load %arg9[%c0_78, %c273_79] : memref<4x290xf32, #tpu.memory_space<vmem>>, vector<4x17xf32>
    tpu.vector_store %arg9[%c0_78, %c273_79], %95 {strides = array<i32>} : memref<4x290xf32, #tpu.memory_space<vmem>>, vector<4x17xf32>,
    %c0_80 = arith.constant 0 : index
    %c17_81 = arith.constant 17 : index
    %97 = vector.load %arg9[%c0_80, %c17_81] : memref<4x290xf32, #tpu.memory_space<vmem>>, vector<4x256xf32>
    tpu.vector_store %arg9[%c0_80, %c17_81], %92 {strides = array<i32>} : memref<4x290xf32, #tpu.memory_space<vmem>>, vector<4x256xf32>,
    %cst_82 = arith.constant 0.000000e+00 : f32
    %98 = vector.broadcast %cst_82 : f32 to vector<4x256xf32>
    %c0_83 = arith.constant 0 : index
    %c0_84 = arith.constant 0 : index
    %99 = vector.load %arg9[%c0_83, %c0_84] : memref<4x290xf32, #tpu.memory_space<vmem>>, vector<4x256xf32>
    %c0_i32_85 = arith.constant 0 : i32
    %100 = arith.sitofp %c0_i32_85 : i32 to f32
    %101 = vector.shape_cast %2 : vector<1x256xi1> to vector<1x256xi1>
    %102 = vector.broadcast %101 : vector<1x256xi1> to vector<4x256xi1>
    %103 = vector.broadcast %100 : f32 to vector<4x256xf32>
    %104 = arith.select %102, %99, %103 : vector<4x256xi1>, vector<4x256xf32>
    %c0_86 = arith.constant 0 : index
    %c0_87 = arith.constant 0 : index
    %c0_88 = arith.constant 0 : index
    %c0_89 = arith.constant 0 : index
    %105 = vector.load %arg5[%c0_86, %c0_87, %c0_88, %c0_89] : memref<3x3x4x4xf32, #tpu.memory_space<vmem>>, vector<1x1x4x4xf32>
    %106 = vector.shape_cast %105 : vector<1x1x4x4xf32> to vector<4x4xf32>
    %cst_90 = arith.constant dense<0.000000e+00> : vector<4x256xf32>
    %107 = tpu.matmul %106, %104, %cst_90 {dimension_numbers = #tpu.dot_dimension_numbers<[1], [0], [0], [1], [0, 0, 1, 1], [], []>} : vector<4x4xf32>, vector<4x256xf32>, vector<4x256xf32> -> vector<4x256xf32>
    %108 = arith.addf %98, %107 : vector<4x256xf32>
    %c0_91 = arith.constant 0 : index
    %c1_92 = arith.constant 1 : index
    %109 = vector.load %arg9[%c0_91, %c1_92] : memref<4x290xf32, #tpu.memory_space<vmem>>, vector<4x256xf32>
    %c0_93 = arith.constant 0 : index
    %c1_94 = arith.constant 1 : index
    %c0_95 = arith.constant 0 : index
    %c0_96 = arith.constant 0 : index
    %110 = vector.load %arg5[%c0_93, %c1_94, %c0_95, %c0_96] : memref<3x3x4x4xf32, #tpu.memory_space<vmem>>, vector<1x1x4x4xf32>
    %111 = vector.shape_cast %110 : vector<1x1x4x4xf32> to vector<4x4xf32>
    %cst_97 = arith.constant dense<0.000000e+00> : vector<4x256xf32>
    %112 = tpu.matmul %111, %109, %cst_97 {dimension_numbers = #tpu.dot_dimension_numbers<[1], [0], [0], [1], [0, 0, 1, 1], [], []>} : vector<4x4xf32>, vector<4x256xf32>, vector<4x256xf32> -> vector<4x256xf32>
    %113 = arith.addf %108, %112 : vector<4x256xf32>
    %c0_98 = arith.constant 0 : index
    %c2_99 = arith.constant 2 : index
    %114 = vector.load %arg9[%c0_98, %c2_99] : memref<4x290xf32, #tpu.memory_space<vmem>>, vector<4x256xf32>
    %c0_i32_100 = arith.constant 0 : i32
    %115 = arith.sitofp %c0_i32_100 : i32 to f32
    %116 = vector.shape_cast %4 : vector<1x256xi1> to vector<1x256xi1>
    %117 = vector.broadcast %116 : vector<1x256xi1> to vector<4x256xi1>
    %118 = vector.broadcast %115 : f32 to vector<4x256xf32>
    %119 = arith.select %117, %114, %118 : vector<4x256xi1>, vector<4x256xf32>
    %c0_101 = arith.constant 0 : index
    %c2_102 = arith.constant 2 : index
    %c0_103 = arith.constant 0 : index
    %c0_104 = arith.constant 0 : index
    %120 = vector.load %arg5[%c0_101, %c2_102, %c0_103, %c0_104] : memref<3x3x4x4xf32, #tpu.memory_space<vmem>>, vector<1x1x4x4xf32>
    %121 = vector.shape_cast %120 : vector<1x1x4x4xf32> to vector<4x4xf32>
    %cst_105 = arith.constant dense<0.000000e+00> : vector<4x256xf32>
    %122 = tpu.matmul %121, %119, %cst_105 {dimension_numbers = #tpu.dot_dimension_numbers<[1], [0], [0], [1], [0, 0, 1, 1], [], []>} : vector<4x4xf32>, vector<4x256xf32>, vector<4x256xf32> -> vector<4x256xf32>
    %123 = arith.addf %113, %122 : vector<4x256xf32>
    %c0_106 = arith.constant 0 : index
    %c16_107 = arith.constant 16 : index
    %124 = vector.load %arg9[%c0_106, %c16_107] : memref<4x290xf32, #tpu.memory_space<vmem>>, vector<4x256xf32>
    %c0_i32_108 = arith.constant 0 : i32
    %125 = arith.sitofp %c0_i32_108 : i32 to f32
    %126 = vector.shape_cast %2 : vector<1x256xi1> to vector<1x256xi1>
    %127 = vector.broadcast %126 : vector<1x256xi1> to vector<4x256xi1>
    %128 = vector.broadcast %125 : f32 to vector<4x256xf32>
    %129 = arith.select %127, %124, %128 : vector<4x256xi1>, vector<4x256xf32>
    %c1_109 = arith.constant 1 : index
    %c0_110 = arith.constant 0 : index
    %c0_111 = arith.constant 0 : index
    %c0_112 = arith.constant 0 : index
    %130 = vector.load %arg5[%c1_109, %c0_110, %c0_111, %c0_112] : memref<3x3x4x4xf32, #tpu.memory_space<vmem>>, vector<1x1x4x4xf32>
    %131 = vector.shape_cast %130 : vector<1x1x4x4xf32> to vector<4x4xf32>
    %cst_113 = arith.constant dense<0.000000e+00> : vector<4x256xf32>
    %132 = tpu.matmul %131, %129, %cst_113 {dimension_numbers = #tpu.dot_dimension_numbers<[1], [0], [0], [1], [0, 0, 1, 1], [], []>} : vector<4x4xf32>, vector<4x256xf32>, vector<4x256xf32> -> vector<4x256xf32>
    %133 = arith.addf %123, %132 : vector<4x256xf32>
    %c0_114 = arith.constant 0 : index
    %c17_115 = arith.constant 17 : index
    %134 = vector.load %arg9[%c0_114, %c17_115] : memref<4x290xf32, #tpu.memory_space<vmem>>, vector<4x256xf32>
    %c1_116 = arith.constant 1 : index
    %c1_117 = arith.constant 1 : index
    %c0_118 = arith.constant 0 : index
    %c0_119 = arith.constant 0 : index
    %135 = vector.load %arg5[%c1_116, %c1_117, %c0_118, %c0_119] : memref<3x3x4x4xf32, #tpu.memory_space<vmem>>, vector<1x1x4x4xf32>
    %136 = vector.shape_cast %135 : vector<1x1x4x4xf32> to vector<4x4xf32>
    %cst_120 = arith.constant dense<0.000000e+00> : vector<4x256xf32>
    %137 = tpu.matmul %136, %134, %cst_120 {dimension_numbers = #tpu.dot_dimension_numbers<[1], [0], [0], [1], [0, 0, 1, 1], [], []>} : vector<4x4xf32>, vector<4x256xf32>, vector<4x256xf32> -> vector<4x256xf32>
    %138 = arith.addf %133, %137 : vector<4x256xf32>
    %c0_121 = arith.constant 0 : index
    %c18_122 = arith.constant 18 : index
    %139 = vector.load %arg9[%c0_121, %c18_122] : memref<4x290xf32, #tpu.memory_space<vmem>>, vector<4x256xf32>
    %c0_i32_123 = arith.constant 0 : i32
    %140 = arith.sitofp %c0_i32_123 : i32 to f32
    %141 = vector.shape_cast %4 : vector<1x256xi1> to vector<1x256xi1>
    %142 = vector.broadcast %141 : vector<1x256xi1> to vector<4x256xi1>
    %143 = vector.broadcast %140 : f32 to vector<4x256xf32>
    %144 = arith.select %142, %139, %143 : vector<4x256xi1>, vector<4x256xf32>
    %c1_124 = arith.constant 1 : index
    %c2_125 = arith.constant 2 : index
    %c0_126 = arith.constant 0 : index
    %c0_127 = arith.constant 0 : index
    %145 = vector.load %arg5[%c1_124, %c2_125, %c0_126, %c0_127] : memref<3x3x4x4xf32, #tpu.memory_space<vmem>>, vector<1x1x4x4xf32>
    %146 = vector.shape_cast %145 : vector<1x1x4x4xf32> to vector<4x4xf32>
    %cst_128 = arith.constant dense<0.000000e+00> : vector<4x256xf32>
    %147 = tpu.matmul %146, %144, %cst_128 {dimension_numbers = #tpu.dot_dimension_numbers<[1], [0], [0], [1], [0, 0, 1, 1], [], []>} : vector<4x4xf32>, vector<4x256xf32>, vector<4x256xf32> -> vector<4x256xf32>
    %148 = arith.addf %138, %147 : vector<4x256xf32>
    %c0_129 = arith.constant 0 : index
    %c32_130 = arith.constant 32 : index
    %149 = vector.load %arg9[%c0_129, %c32_130] : memref<4x290xf32, #tpu.memory_space<vmem>>, vector<4x256xf32>
    %c0_i32_131 = arith.constant 0 : i32
    %150 = arith.sitofp %c0_i32_131 : i32 to f32
    %151 = vector.shape_cast %2 : vector<1x256xi1> to vector<1x256xi1>
    %152 = vector.broadcast %151 : vector<1x256xi1> to vector<4x256xi1>
    %153 = vector.broadcast %150 : f32 to vector<4x256xf32>
    %154 = arith.select %152, %149, %153 : vector<4x256xi1>, vector<4x256xf32>
    %c2_132 = arith.constant 2 : index
    %c0_133 = arith.constant 0 : index
    %c0_134 = arith.constant 0 : index
    %c0_135 = arith.constant 0 : index
    %155 = vector.load %arg5[%c2_132, %c0_133, %c0_134, %c0_135] : memref<3x3x4x4xf32, #tpu.memory_space<vmem>>, vector<1x1x4x4xf32>
    %156 = vector.shape_cast %155 : vector<1x1x4x4xf32> to vector<4x4xf32>
    %cst_136 = arith.constant dense<0.000000e+00> : vector<4x256xf32>
    %157 = tpu.matmul %156, %154, %cst_136 {dimension_numbers = #tpu.dot_dimension_numbers<[1], [0], [0], [1], [0, 0, 1, 1], [], []>} : vector<4x4xf32>, vector<4x256xf32>, vector<4x256xf32> -> vector<4x256xf32>
    %158 = arith.addf %148, %157 : vector<4x256xf32>
    %c0_137 = arith.constant 0 : index
    %c33_138 = arith.constant 33 : index
    %159 = vector.load %arg9[%c0_137, %c33_138] : memref<4x290xf32, #tpu.memory_space<vmem>>, vector<4x256xf32>
    %c2_139 = arith.constant 2 : index
    %c1_140 = arith.constant 1 : index
    %c0_141 = arith.constant 0 : index
    %c0_142 = arith.constant 0 : index
    %160 = vector.load %arg5[%c2_139, %c1_140, %c0_141, %c0_142] : memref<3x3x4x4xf32, #tpu.memory_space<vmem>>, vector<1x1x4x4xf32>
    %161 = vector.shape_cast %160 : vector<1x1x4x4xf32> to vector<4x4xf32>
    %cst_143 = arith.constant dense<0.000000e+00> : vector<4x256xf32>
    %162 = tpu.matmul %161, %159, %cst_143 {dimension_numbers = #tpu.dot_dimension_numbers<[1], [0], [0], [1], [0, 0, 1, 1], [], []>} : vector<4x4xf32>, vector<4x256xf32>, vector<4x256xf32> -> vector<4x256xf32>
    %163 = arith.addf %158, %162 : vector<4x256xf32>
    %c0_144 = arith.constant 0 : index
    %c34_145 = arith.constant 34 : index
    %164 = vector.load %arg9[%c0_144, %c34_145] : memref<4x290xf32, #tpu.memory_space<vmem>>, vector<4x256xf32>
    %c0_i32_146 = arith.constant 0 : i32
    %165 = arith.sitofp %c0_i32_146 : i32 to f32
    %166 = vector.shape_cast %4 : vector<1x256xi1> to vector<1x256xi1>
    %167 = vector.broadcast %166 : vector<1x256xi1> to vector<4x256xi1>
    %168 = vector.broadcast %165 : f32 to vector<4x256xf32>
    %169 = arith.select %167, %164, %168 : vector<4x256xi1>, vector<4x256xf32>
    %c2_147 = arith.constant 2 : index
    %c2_148 = arith.constant 2 : index
    %c0_149 = arith.constant 0 : index
    %c0_150 = arith.constant 0 : index
    %170 = vector.load %arg5[%c2_147, %c2_148, %c0_149, %c0_150] : memref<3x3x4x4xf32, #tpu.memory_space<vmem>>, vector<1x1x4x4xf32>
    %171 = vector.shape_cast %170 : vector<1x1x4x4xf32> to vector<4x4xf32>
    %cst_151 = arith.constant dense<0.000000e+00> : vector<4x256xf32>
    %172 = tpu.matmul %171, %169, %cst_151 {dimension_numbers = #tpu.dot_dimension_numbers<[1], [0], [0], [1], [0, 0, 1, 1], [], []>} : vector<4x4xf32>, vector<4x256xf32>, vector<4x256xf32> -> vector<4x256xf32>
    %173 = arith.addf %163, %172 : vector<4x256xf32>
    %c0_152 = arith.constant 0 : index
    %c0_153 = arith.constant 0 : index
    %174 = vector.load %arg6[%c0_152, %c0_153] : memref<4x1xf32, #tpu.memory_space<vmem>>, vector<4x1xf32>
    %175 = vector.broadcast %174 : vector<4x1xf32> to vector<4x256xf32>
    %176 = arith.addf %173, %175 : vector<4x256xf32>
    %177 = arith.addf %176, %6 : vector<4x256xf32>
    %cst_154 = arith.constant 0.000000e+00 : f32
    %178 = vector.broadcast %cst_154 : f32 to vector<4x256xf32>
    %179 = arith.maximumf %177, %178 : vector<4x256xf32>
    %c0_155 = arith.constant 0 : index
    %c0_156 = arith.constant 0 : index
    %c0_157 = arith.constant 0 : index
    %180 = vector.load %arg7[%c0_155, %c0_156, %c0_157] : memref<1x4x256xf32, #tpu.memory_space<vmem>>, vector<1x4x256xf32>
    %181 = vector.shape_cast %180 : vector<1x4x256xf32> to vector<4x256xf32>
    %182 = vector.shape_cast %179 : vector<4x256xf32> to vector<1x4x256xf32>
    tpu.vector_store %arg7[%c0_155, %c0_156, %c0_157], %182 {strides = array<i32>} : memref<1x4x256xf32, #tpu.memory_space<vmem>>, vector<1x4x256xf32>,
    return
  }
  func.func @transform_0(%arg0: i32) -> (i32, i32) {
    %c0_i32 = arith.constant 0 : i32
    %c0_i32_0 = arith.constant 0 : i32
    %c0_i32_1 = arith.constant 0 : i32
    return %c0_i32, %c0_i32_0 : i32, i32
  }
  func.func @transform_1(%arg0: i32) -> (i32, i32, i32) {
    %c0_i32 = arith.constant 0 : i32
    %c0_i32_0 = arith.constant 0 : i32
    %c0_i32_1 = arith.constant 0 : i32
    return %arg0, %c0_i32, %c0_i32_0 : i32, i32, i32
  }
  func.func @transform_2(%arg0: i32) -> (i32, i32, i32, i32) {
    %c0_i32 = arith.constant 0 : i32
    %c0_i32_0 = arith.constant 0 : i32
    %c0_i32_1 = arith.constant 0 : i32
    %c0_i32_2 = arith.constant 0 : i32
    %c0_i32_3 = arith.constant 0 : i32
    return %c0_i32, %c0_i32_0, %c0_i32_1, %c0_i32_2 : i32, i32, i32, i32
  }
  func.func @transform_3(%arg0: i32) -> (i32, i32) {
    %c0_i32 = arith.constant 0 : i32
    %c0_i32_0 = arith.constant 0 : i32
    %c0_i32_1 = arith.constant 0 : i32
    return %c0_i32, %c0_i32_0 : i32, i32
  }
  func.func @transform_4(%arg0: i32) -> (i32, i32, i32, i32) {
    %c0_i32 = arith.constant 0 : i32
    %c0_i32_0 = arith.constant 0 : i32
    %c0_i32_1 = arith.constant 0 : i32
    %c0_i32_2 = arith.constant 0 : i32
    %c0_i32_3 = arith.constant 0 : i32
    return %c0_i32, %c0_i32_0, %c0_i32_1, %c0_i32_2 : i32, i32, i32, i32
  }
  func.func @transform_5(%arg0: i32) -> (i32, i32) {
    %c0_i32 = arith.constant 0 : i32
    %c0_i32_0 = arith.constant 0 : i32
    %c0_i32_1 = arith.constant 0 : i32
    return %c0_i32, %c0_i32_0 : i32, i32
  }
  func.func @transform_6(%arg0: i32) -> (i32, i32, i32) {
    %c0_i32 = arith.constant 0 : i32
    %c0_i32_0 = arith.constant 0 : i32
    %c0_i32_1 = arith.constant 0 : i32
    return %arg0, %c0_i32, %c0_i32_0 : i32, i32, i32
  }
}

</mosaic_0001>

<llo_original>
// kernel: tpu_custom_call.1
$region0: #{tpu_custom_call.1}
  #allocation0 [shape = 'u32[]', space=smem, size = 0x4, offset = 0x4, fixed_abs, tag = 'smem constant byte address 0x4 - core index']
  #allocation1 [shape = 'u32[72,128]{1,0:T(1,128)}', space=vmem, size = 0x9000, scoped, tag = 'internal scratch']
  #allocation2 [shape = 'f32[4,290]{1,0:T(4,128)}', space=vmem, size = 0x1800, scoped, tag = 'scratch operand']
  #allocation3 [shape = 'f32[4,290]{1,0:T(4,128)}', space=vmem, size = 0x1800, scoped, tag = 'scratch operand']
  %s0 = inlined_call_operand.vmem [shape: s32[1,256], index: 0, kind: input, shape index: {}]
  %s1 = inlined_call_operand.hbm [shape: f32[2,4,256], index: 1, kind: input, shape index: {}]
  %s2 = inlined_call_operand.hbm [shape: f32[3,3,4,4], index: 2, kind: input, shape index: {}]
  %s3 = inlined_call_operand.vmem [shape: f32[4,1], index: 3, kind: input, shape index: {}]
  %s4 = inlined_call_operand.hbm [shape: f32[3,3,4,4], index: 4, kind: input, shape index: {}]
  %s5 = inlined_call_operand.vmem [shape: f32[4,1], index: 5, kind: input, shape index: {}]
  %s6 = inlined_call_operand.hbm [shape: f32[2,4,256], index: 6, kind: output, shape index: {}]
  %s7 = sld [smem:[#allocation0]]
  $region69: #{tpu_custom_call.1} parent=0
    _
  %s9 = ssub.s32 1, %s7
  %s10 = scalar_select 0, %s9, %s7
  $region1: #{tpu_custom_call.1} parent=0
    #allocation4 [shape = 'u8[8192]{0}', space=vmem, size = 0x2000, scoped, tag = 'input window, operand 1']
    #allocation5 [shape = 's32[2]{0}', space=sflag, size = 0x8, scoped, tag = 'scoped memory for tpu_custom_call.1']
    #allocation6 [shape = 's32[2]{0}', space=sflag, size = 0x8, scoped, tag = 'scoped memory for tpu_custom_call.1']
    #allocation7 [shape = 'u8[18432]{0}', space=vmem, size = 0x4800, scoped, tag = 'input window, operand 2, single buffered']
    #allocation8 [shape = 's32[1]{0}', space=sflag, size = 0x4, scoped, tag = 'scoped memory for tpu_custom_call.1']
    #allocation9 [shape = 'u8[18432]{0}', space=vmem, size = 0x4800, scoped, tag = 'input window, operand 4, single buffered']
    #allocation10 [shape = 'u8[8192]{0}', space=vmem, size = 0x2000, scoped, tag = 'output window, operand 0']
    %11 = vsyncpa [#allocation5], 0
    %s12 = scalar_lea.sflag [#allocation5], 1
    %13 = vsyncpa %s12, 0
    %14 = vsyncpa [#allocation8], 0
    %15 = vsyncpa [#allocation6], 0
    %s16 = scalar_lea.sflag [#allocation6], 1
    %17 = vsyncpa %s16, 0
    loop: start=0, step=1, limit=4
    $region2: #{tpu_custom_call.1} parent=1 // loop_pre_header
      _
    $region3: #{tpu_custom_call.1} parent=1 // loop_header
      %s19 = sphi 0, %s23
      %p20 = scmp.ge.s32.totalorder %s19, 4
      %s27 = sphi 0, %s27
      %s29 = sphi 0, %s27
      %s30 = sphi 0, %s29
      %s44 = sphi 0, %s30
      %s50 = sphi 0, %s52
      %s53 = sphi 0, %s50
      %s54 = sphi 0, %s53
      %s70 = sphi 0, %s54
      %s74 = sphi 0, %s74
      %s76 = sphi 0, %s74
      %s77 = sphi 0, %s76
      %s91 = sphi 0, %s77
      %s95 = sphi 0, %s95
      %s97 = sphi 0, %s95
      %s98 = sphi 0, %s97
      %s112 = sphi 0, %s98
      %s116 = sphi 0, %s116
      %s118 = sphi 0, %s116
      %s119 = sphi 0, %s118
      %s133 = sphi 0, %s119
      %s137 = sphi 0, %s137
      %s139 = sphi 0, %s137
      %s140 = sphi 0, %s139
      %s154 = sphi 0, %s140
      %s160 = sphi 0, %s162
      %s163 = sphi 0, %s160
      %s164 = sphi 0, %s163
      %s180 = sphi 0, %s164
    $region4: #{tpu_custom_call.1} parent=1 // loop_header_branch
      %22 = sbr.rel (%p20) target = $region8
    $region5: #{tpu_custom_call.1} parent=1 // loop_body
      %s24 = ssub.s32 %s19, 1
      %s25 = ssub.s32 %s19, 2
      %s26 = sadd.s32 %s19, 1
      %s28 = sadd.s32 %s27, 1
      %p31 = scmp.eq.s32.totalorder %s19, 1
      %p32 = scmp.ne.s32.totalorder %s27, %s29
      %p33 = scmp.eq.s32.totalorder %s19, 0
      %p34 = por %p32, %p33
      %p35 = scmp.ne.s32.totalorder %s27, %s29
      %p36 = scmp.eq.s32.totalorder %s24, 1
      %p37 = por %p35, %p36
      %p38 = scmp.ne.s32.totalorder %s29, %s30
      %p39 = scmp.eq.s32.totalorder %s24, 0
      %p40 = por %p38, %p39
      %p41 = scmp.ne.s32.totalorder %s29, %s30
      %p42 = scmp.eq.s32.totalorder %s25, 1
      %p43 = por %p41, %p42
      %p45 = scmp.ne.s32.totalorder %s30, %s44
      %p46 = scmp.eq.s32.totalorder %s25, 0
      %p47 = por %p45, %p46
      %s48 = ssub.s32 %s19, %s26
      %p49 = scmp.eq.s32.totalorder %s48, 0
      %s51 = sadd.s32 %s50, 1
      %s52 = scalar_select %p49, %s50, %s51
      %p55 = pneg %p49
      %p56 = scmp.eq.s32.totalorder %s19, 1
      %p57 = por %p55, %p56
      %p58 = scmp.ne.s32.totalorder %s50, %s53
      %p59 = scmp.eq.s32.totalorder %s19, 0
      %p60 = por %p58, %p59
      %p61 = scmp.ne.s32.totalorder %s50, %s53
      %p62 = scmp.eq.s32.totalorder %s24, 1
      %p63 = por %p61, %p62
      %p64 = scmp.ne.s32.totalorder %s53, %s54
      %p65 = scmp.eq.s32.totalorder %s24, 0
      %p66 = por %p64, %p65
      %p67 = scmp.ne.s32.totalorder %s53, %s54
      %p68 = scmp.eq.s32.totalorder %s25, 1
      %p69 = por %p67, %p68
      %p71 = scmp.ne.s32.totalorder %s54, %s70
      %p72 = scmp.eq.s32.totalorder %s25, 0
      %p73 = por %p71, %p72
      %s75 = sadd.s32 %s74, 1
      %p78 = scmp.eq.s32.totalorder %s19, 1
      %p79 = scmp.ne.s32.totalorder %s74, %s76
      %p80 = scmp.eq.s32.totalorder %s19, 0
      %p81 = por %p79, %p80
      %p82 = scmp.ne.s32.totalorder %s74, %s76
      %p83 = scmp.eq.s32.totalorder %s24, 1
      %p84 = por %p82, %p83
      %p85 = scmp.ne.s32.totalorder %s76, %s77
      %p86 = scmp.eq.s32.totalorder %s24, 0
      %p87 = por %p85, %p86
      %p88 = scmp.ne.s32.totalorder %s76, %s77
      %p89 = scmp.eq.s32.totalorder %s25, 1
      %p90 = por %p88, %p89
      %p92 = scmp.ne.s32.totalorder %s77, %s91
      %p93 = scmp.eq.s32.totalorder %s25, 0
      %p94 = por %p92, %p93
      %s96 = sadd.s32 %s95, 1
      %p99 = scmp.eq.s32.totalorder %s19, 1
      %p100 = scmp.ne.s32.totalorder %s95, %s97
      %p101 = scmp.eq.s32.totalorder %s19, 0
      %p102 = por %p100, %p101
      %p103 = scmp.ne.s32.totalorder %s95, %s97
      %p104 = scmp.eq.s32.totalorder %s24, 1
      %p105 = por %p103, %p104
      %p106 = scmp.ne.s32.totalorder %s97, %s98
      %p107 = scmp.eq.s32.totalorder %s24, 0
      %p108 = por %p106, %p107
      %p109 = scmp.ne.s32.totalorder %s97, %s98
      %p110 = scmp.eq.s32.totalorder %s25, 1
      %p111 = por %p109, %p110
      %p113 = scmp.ne.s32.totalorder %s98, %s112
      %p114 = scmp.eq.s32.totalorder %s25, 0
      %p115 = por %p113, %p114
      %s117 = sadd.s32 %s116, 1
      %p120 = scmp.eq.s32.totalorder %s19, 1
      %p121 = scmp.ne.s32.totalorder %s116, %s118
      %p122 = scmp.eq.s32.totalorder %s19, 0
      %p123 = por %p121, %p122
      %p124 = scmp.ne.s32.totalorder %s116, %s118
      %p125 = scmp.eq.s32.totalorder %s24, 1
      %p126 = por %p124, %p125
      %p127 = scmp.ne.s32.totalorder %s118, %s119
      %p128 = scmp.eq.s32.totalorder %s24, 0
      %p129 = por %p127, %p128
      %p130 = scmp.ne.s32.totalorder %s118, %s119
      %p131 = scmp.eq.s32.totalorder %s25, 1
      %p132 = por %p130, %p131
      %p134 = scmp.ne.s32.totalorder %s119, %s133
      %p135 = scmp.eq.s32.totalorder %s25, 0
      %p136 = por %p134, %p135
      %s138 = sadd.s32 %s137, 1
      %p141 = scmp.eq.s32.totalorder %s19, 1
      %p142 = scmp.ne.s32.totalorder %s137, %s139
      %p143 = scmp.eq.s32.totalorder %s19, 0
      %p144 = por %p142, %p143
      %p145 = scmp.ne.s32.totalorder %s137, %s139
      %p146 = scmp.eq.s32.totalorder %s24, 1
      %p147 = por %p145, %p146
      %p148 = scmp.ne.s32.totalorder %s139, %s140
      %p149 = scmp.eq.s32.totalorder %s24, 0
      %p150 = por %p148, %p149
      %p151 = scmp.ne.s32.totalorder %s139, %s140
      %p152 = scmp.eq.s32.totalorder %s25, 1
      %p153 = por %p151, %p152
      %p155 = scmp.ne.s32.totalorder %s140, %s154
      %p156 = scmp.eq.s32.totalorder %s25, 0
      %p157 = por %p155, %p156
      %s158 = ssub.s32 %s19, %s26
      %p159 = scmp.eq.s32.totalorder %s158, 0
      %s161 = sadd.s32 %s160, 1
      %s162 = scalar_select %p159, %s160, %s161
      %p165 = pneg %p159
      %p166 = scmp.eq.s32.totalorder %s19, 1
      %p167 = por %p165, %p166
      %p168 = scmp.ne.s32.totalorder %s160, %s163
      %p169 = scmp.eq.s32.totalorder %s19, 0
      %p170 = por %p168, %p169
      %p171 = scmp.ne.s32.totalorder %s160, %s163
      %p172 = scmp.eq.s32.totalorder %s24, 1
      %p173 = por %p171, %p172
      %p174 = scmp.ne.s32.totalorder %s163, %s164
      %p175 = scmp.eq.s32.totalorder %s24, 0
      %p176 = por %p174, %p175
      %p177 = scmp.ne.s32.totalorder %s163, %s164
      %p178 = scmp.eq.s32.totalorder %s25, 1
      %p179 = por %p177, %p178
      %p181 = scmp.ne.s32.totalorder %s164, %s180
      %p182 = scmp.eq.s32.totalorder %s25, 0
      %p183 = por %p181, %p182
      %p184 = scmp.le.s32.totalorder 1, %s19
      %p185 = scmp.lt.s32.totalorder %s19, 3
      %p186 = pnand %p184, %p185
      %p187 = pneg %p186
      // Predicated region
      $region9: #{tpu_custom_call.1} parent=5 // pred_check
        _
      $region10: #{tpu_custom_call.1} parent=5 // pred_check_branch
        %189 = sbr.rel (%p186) target = $region12
      $region11: #{tpu_custom_call.1} parent=5 // pred_region
        %s190 = ssub.s32 %s19, 1
        // Predicated region
        $region13: #{tpu_custom_call.1} parent=11 // pred_check
          %p191 = pneg %p40
        $region14: #{tpu_custom_call.1} parent=11 // pred_check_branch
          %193 = sbr.rel (%p191) target = $region16
        $region15: #{tpu_custom_call.1} parent=11 // pred_region
          _
        $region16: #{tpu_custom_call.1} parent=11 // pred_fallthru
          _
        // Predicated region
        $region17: #{tpu_custom_call.1} parent=11 // pred_check
          %p194 = pneg %p87
        $region18: #{tpu_custom_call.1} parent=11 // pred_check_branch
          %196 = sbr.rel (%p194) target = $region20
        $region19: #{tpu_custom_call.1} parent=11 // pred_region
          %198 = vsyncadd [#allocation8], 0
          %s199 = sshll.u32 %s2, 4
          %s200 = int_to_ptr.hbm [resolvable:$true] %s199
          %s201 = sshll.u32 [#allocation7], 4
          %s202 = int_to_ptr.vmem [resolvable:$true] %s201
          %207 = dma.hbm_to_vmem [thread:$0]  %s200, 576, %s202, [#allocation8], 64, 64, 4
        $region20: #{tpu_custom_call.1} parent=11 // pred_fallthru
          _
        // Predicated region
        $region21: #{tpu_custom_call.1} parent=11 // pred_check
          %p208 = pneg %p108
        $region22: #{tpu_custom_call.1} parent=11 // pred_check_branch
          %210 = sbr.rel (%p208) target = $region24
        $region23: #{tpu_custom_call.1} parent=11 // pred_region
          _
        $region24: #{tpu_custom_call.1} parent=11 // pred_fallthru
          _
        // Predicated region
        $region25: #{tpu_custom_call.1} parent=11 // pred_check
          %p211 = pneg %p129
        $region26: #{tpu_custom_call.1} parent=11 // pred_check_branch
          %213 = sbr.rel (%p211) target = $region28
        $region27: #{tpu_custom_call.1} parent=11 // pred_region
          %215 = vsyncadd [#allocation8], 0
          %s216 = sshll.u32 %s4, 4
          %s217 = int_to_ptr.hbm [resolvable:$true] %s216
          %s218 = sshll.u32 [#allocation9], 4
          %s219 = int_to_ptr.vmem [resolvable:$true] %s218
          %224 = dma.hbm_to_vmem [thread:$0]  %s217, 576, %s219, [#allocation8], 64, 64, 4
        $region28: #{tpu_custom_call.1} parent=11 // pred_fallthru
          _
        // Predicated region
        $region29: #{tpu_custom_call.1} parent=11 // pred_check
          %p225 = pneg %p150
        $region30: #{tpu_custom_call.1} parent=11 // pred_check_branch
          %227 = sbr.rel (%p225) target = $region32
        $region31: #{tpu_custom_call.1} parent=11 // pred_region
          _
        $region32: #{tpu_custom_call.1} parent=11 // pred_fallthru
          _
      $region12: #{tpu_custom_call.1} parent=5 // pred_fallthru
        _
      %p228 = scmp.lt.s32.totalorder %s19, 2
      // Predicated region
      $region33: #{tpu_custom_call.1} parent=5 // pred_check
        %p229 = pneg %p228
      $region34: #{tpu_custom_call.1} parent=5 // pred_check_branch
        %231 = sbr.rel (%p229) target = $region36
      $region35: #{tpu_custom_call.1} parent=5 // pred_region
        // Predicated region
        $region37: #{tpu_custom_call.1} parent=35 // pred_check
          %p232 = pneg %p60
        $region38: #{tpu_custom_call.1} parent=35 // pred_check_branch
          %234 = sbr.rel (%p232) target = $region40
        $region39: #{tpu_custom_call.1} parent=35 // pred_region
          %s235 = sand.u32 %s50, 1
          %s236 = scalar_lea.sflag [#allocation5], %s235
          %s237 = sand.u32 %s50, 1
          %s238 = smul.addr %s237, 8
          %s239 = scalar_lea.vmem [#allocation4], %s238
          %241 = vsyncadd %s236, 0
          %s242 = smul.addr %s19, 2
          %s243 = smul.addr %s242, 4
          %s244 = scalar_lea.hbm %s1, %s243
          %s246 = sshll.u32 %s244, 4
          %s247 = int_to_ptr.hbm [resolvable:$true] %s246
          %s248 = sshll.u32 %s239, 4
          %s249 = int_to_ptr.vmem [resolvable:$true] %s248
          %251 = dma.hbm_to_vmem [thread:$0]  %s247, 128, %s249, %s236
        $region40: #{tpu_custom_call.1} parent=35 // pred_fallthru
          _
      $region36: #{tpu_custom_call.1} parent=5 // pred_fallthru
        _
      %p252 = scmp.le.s32.totalorder 1, %s19
      %p253 = scmp.lt.s32.totalorder %s19, 3
      %p254 = pnand %p252, %p253
      %p255 = pneg %p254
      // Predicated region
      $region41: #{tpu_custom_call.1} parent=5 // pred_check
        _
      $region42: #{tpu_custom_call.1} parent=5 // pred_check_branch
        %257 = sbr.rel (%p254) target = $region44
      $region43: #{tpu_custom_call.1} parent=5 // pred_region
        %s258 = ssub.s32 %s19, 1
        %s259 = sand.u32 %s53, 1
        %s260 = scalar_lea.sflag [#allocation5], %s259
        %s261 = sand.u32 %s53, 1
        %s262 = smul.addr %s261, 8
        %s263 = scalar_lea.vmem [#allocation4], %s262
        // Predicated region
        $region45: #{tpu_custom_call.1} parent=43 // pred_check
          %p264 = pneg %p66
        $region46: #{tpu_custom_call.1} parent=43 // pred_check_branch
          %266 = sbr.rel (%p264) target = $region48
        $region47: #{tpu_custom_call.1} parent=43 // pred_region
          %268 = dma.done %s260, 128
        $region48: #{tpu_custom_call.1} parent=43 // pred_fallthru
          _
        // Predicated region
        $region49: #{tpu_custom_call.1} parent=43 // pred_check
          %p269 = pneg %p87
        $region50: #{tpu_custom_call.1} parent=43 // pred_check_branch
          %271 = sbr.rel (%p269) target = $region52
        $region51: #{tpu_custom_call.1} parent=43 // pred_region
          %273 = dma.done [#allocation8], 576
        $region52: #{tpu_custom_call.1} parent=43 // pred_fallthru
          _
        // Predicated region
        $region53: #{tpu_custom_call.1} parent=43 // pred_check
          %p274 = pneg %p129
        $region54: #{tpu_custom_call.1} parent=43 // pred_check_branch
          %276 = sbr.rel (%p274) target = $region56
        $region55: #{tpu_custom_call.1} parent=43 // pred_region
          %278 = dma.done [#allocation8], 576
        $region56: #{tpu_custom_call.1} parent=43 // pred_fallthru
          _
        %p279 = pneg %p40
        %p280 = pneg %p37
        %s281 = sand.u32 %s53, 1
        %s282 = scalar_lea.sflag [#allocation5], %s281
        %s283 = sand.u32 %s53, 1
        %s284 = smul.addr %s283, 8
        %s285 = scalar_lea.vmem [#allocation4], %s284
        %p286 = pneg %p66
        %p287 = pneg %p63
        %p288 = pneg %p87
        %p289 = pneg %p84
        %p290 = pneg %p108
        %p291 = pneg %p105
        %p292 = pneg %p129
        %p293 = pneg %p126
        %p294 = pneg %p150
        %p295 = pneg %p147
        %p296 = pneg %p176
        %p297 = pneg %p173
        %s298 = sand.u32 %s163, 1
        %s299 = scalar_lea.sflag [#allocation6], %s298
        %s300 = sand.u32 %s163, 1
        %s301 = smul.addr %s300, 8
        %s302 = scalar_lea.vmem [#allocation10], %s301
        %v303 = vld [vmem:[%s0] sm:$0x3]
        %vm304 = vcmp.ge.s32.totalorder %v303, 1
        %vm305 = vcmp.lt.s32.totalorder %v303, 15
        %v306 = vld [vmem:[%s263] sm:$0xff]
        %vm307 = vcmask 134144
        %308 = vst.msk [vmem:[#allocation2] sm:$0xf] %vm307, 0.0
        %vm309 = vcmask 273544
        %310 = vst.msk [vmem:[#allocation2 + $0x8] sm:$0xf] %vm309, 0.0
        %312 = vrot.lane.b32.xlu0 %v306, 17
        %v313 = vpop.permute.xlu0 %312
        %v314 = vrot.slane %v313, 4
        %vm315 = vcmask 138240
        %v316 = vsel %vm315, %v314, %v313
        %vm319 = vcmask 1043592
        %vm320 = vcmask 1047556
        %vm321 = vmor %vm320, %vm319
        %322 = vst.msk [vmem:[#allocation2] sm:$0xff] %vm321, %v316
        %323 = vst.msk [vmem:[#allocation2 + $0x8] sm:$0xf] %vm307, %v314
        %v324 = vld [vmem:[#allocation2] sm:$0xff]
        %v325 = vsel %vm304, 1, 0
        %v326 = vperm.slane %v325, 0
        %v327 = vperm.slane %v325, 1
        %vm328 = vcmp.eq.s32.totalorder %v326, 1
        %vm329 = vcmp.eq.s32.totalorder %v327, 1
        %331 = vst [vmem:[#allocation1] ss:$2 sm:$0xff] %v324
        %v332 = vld.sshfl [vmem:[#allocation1] sm:$0xff pattern:$0x75316420]
        %v333 = vld.sshfl [vmem:[#allocation1 + $0x8] sm:$0xff pattern:$0x75316420]
        %v336 = vsel %vm328, %v332, 0.0
        %v337 = vsel %vm329, %v333, 0.0
        %v338 = vld [vmem:[#allocation7] sm:$0xf]
        %v339 = vld [vmem:[#allocation2] sm:$0xff]
        %v340 = vld [vmem:[#allocation2 + $0x8] sm:$0xf]
        %s341 = scalar_lea.vmem [#allocation7], 4
        %v342 = vld [vmem:[%s341] sm:$0xf]
        %345 = vst [vmem:[#allocation1] ss:$2 sm:$0xff] %v339
        %s346 = scalar_lea.vmem [#allocation1], 16
        %347 = vst [vmem:[%s346] ss:$2 sm:$0xff] %v340
        %v348 = vld.sshfl [vmem:[#allocation1] sm:$0xff pattern:$0x75316420]
        %v349 = vld.sshfl [vmem:[#allocation1 + $0x8] sm:$0xff pattern:$0x75316420]
        %v350 = vld.sshfl [vmem:[#allocation1 + $0x10] sm:$0xff pattern:$0x75316420]
        %351 = vrot.lane.b32.xlu0 %v348, 127
        %v352 = vpop.permute.xlu0 %351
        %353 = vrot.lane.b32.xlu0 %v349, 127
        %v354 = vpop.permute.xlu0 %353
        %355 = vrot.lane.b32.xlu0 %v350, 127
        %v356 = vpop.permute.xlu0 %355
        %vm357 = vcmask 1039360
        %v358 = vsel %vm357, %v352, %v354
        %v359 = vsel %vm357, %v354, %v356
        %vm360 = vcmask 31744
        %v362 = vsel %vm360, %v342, 0
        %vm364 = vcmask 1043456
        %v365 = vsel %vm364, %v358, 0
        %v367 = vsel %vm364, %v359, 0
        %369 = vmatpush.msra.mxu0 0.0
        %370 = vmatpush.msra.mxu0 0.0
        %371 = vmatpush.msra.mxu0 0.0
        %372 = vmatpush.msra.mxu0 0.0
        %373 = vmatpush.msra.mxu0 0.0
        %374 = vmatpush.msra.mxu0 0.0
        %375 = vmatpush.msra.mxu0 0.0
        %376 = vmatpush.msra.mxu0 0.0
        %377 = vmatpush.msra.mxu0 0.0
        %378 = vmatpush.msra.mxu0 0.0
        %379 = vmatpush.msra.mxu0 0.0
        %380 = vmatpush.msra.mxu0 0.0
        %381 = vmatpush.msra.mxu0 0.0
        %382 = vmatpush.msra.mxu0 0.0
        %383 = vmatpush.msra.mxu0 0.0
        %384 = vmatpush.msra.mxu0 %v365
        %385 = vmatmul.f32.gmra.mxu0 %v362
        %v386 = vpop.f32.mrf.mxu0
        %v387 = vadd.f32 0.0, %v386
        %388 = vdwg.mxu0
        %389 = vmatpush.msra.mxu0 0.0
        %390 = vmatpush.msra.mxu0 0.0
        %391 = vmatpush.msra.mxu0 0.0
        %392 = vmatpush.msra.mxu0 0.0
        %393 = vmatpush.msra.mxu0 0.0
        %394 = vmatpush.msra.mxu0 0.0
        %395 = vmatpush.msra.mxu0 0.0
        %396 = vmatpush.msra.mxu0 0.0
        %397 = vmatpush.msra.mxu0 0.0
        %398 = vmatpush.msra.mxu0 0.0
        %399 = vmatpush.msra.mxu0 0.0
        %400 = vmatpush.msra.mxu0 0.0
        %401 = vmatpush.msra.mxu0 0.0
        %402 = vmatpush.msra.mxu0 0.0
        %403 = vmatpush.msra.mxu0 0.0
        %404 = vmatpush.msra.mxu0 %v367
        %405 = vmatmul.f32.gmra.mxu0 %v362
        %v406 = vpop.f32.mrf.mxu0
        %v407 = vadd.f32 0.0, %v406
        %408 = vdwg.mxu0
        %v410 = vsel %vm360, %v338, 0
        %v413 = vsel %vm364, %v336, 0
        %v416 = vsel %vm364, %v337, 0
        %418 = vmatpush.msra.mxu0 0.0
        %419 = vmatpush.msra.mxu0 0.0
        %420 = vmatpush.msra.mxu0 0.0
        %421 = vmatpush.msra.mxu0 0.0
        %422 = vmatpush.msra.mxu0 0.0
        %423 = vmatpush.msra.mxu0 0.0
        %424 = vmatpush.msra.mxu0 0.0
        %425 = vmatpush.msra.mxu0 0.0
        %426 = vmatpush.msra.mxu0 0.0
        %427 = vmatpush.msra.mxu0 0.0
        %428 = vmatpush.msra.mxu0 0.0
        %429 = vmatpush.msra.mxu0 0.0
        %430 = vmatpush.msra.mxu0 0.0
        %431 = vmatpush.msra.mxu0 0.0
        %432 = vmatpush.msra.mxu0 0.0
        %433 = vmatpush.msra.mxu0 %v413
        %434 = vmatmul.f32.gmra.mxu0 %v410
        %v435 = vpop.f32.mrf.mxu0
        %v436 = vadd.f32 %v387, %v435
        %437 = vdwg.mxu0
        %438 = vmatpush.msra.mxu0 0.0
        %439 = vmatpush.msra.mxu0 0.0
        %440 = vmatpush.msra.mxu0 0.0
        %441 = vmatpush.msra.mxu0 0.0
        %442 = vmatpush.msra.mxu0 0.0
        %443 = vmatpush.msra.mxu0 0.0
        %444 = vmatpush.msra.mxu0 0.0
        %445 = vmatpush.msra.mxu0 0.0
        %446 = vmatpush.msra.mxu0 0.0
        %447 = vmatpush.msra.mxu0 0.0
        %448 = vmatpush.msra.mxu0 0.0
        %449 = vmatpush.msra.mxu0 0.0
        %450 = vmatpush.msra.mxu0 0.0
        %451 = vmatpush.msra.mxu0 0.0
        %452 = vmatpush.msra.mxu0 0.0
        %453 = vmatpush.msra.mxu0 %v416
        %454 = vmatmul.f32.gmra.mxu0 %v410
        %v455 = vpop.f32.mrf.mxu0
        %v456 = vadd.f32 %v407, %v455
        %457 = vdwg.mxu0
        %v458 = vld [vmem:[#allocation2] sm:$0xff]
        %v459 = vld [vmem:[#allocation2 + $0x8] sm:$0xf]
        %v460 = vsel %vm305, 1, 0
        %v461 = vperm.slane %v460, 0
        %v462 = vperm.slane %v460, 1
        %vm463 = vcmp.eq.s32.totalorder %v461, 1
        %vm464 = vcmp.eq.s32.totalorder %v462, 1
        %467 = vst [vmem:[#allocation1] ss:$2 sm:$0xff] %v458
        %s468 = scalar_lea.vmem [#allocation1], 16
        %469 = vst [vmem:[%s468] ss:$2 sm:$0xff] %v459
        %v470 = vld.sshfl [vmem:[#allocation1] sm:$0xff pattern:$0x75316420]
        %v471 = vld.sshfl [vmem:[#allocation1 + $0x8] sm:$0xff pattern:$0x75316420]
        %v472 = vld.sshfl [vmem:[#allocation1 + $0x10] sm:$0xff pattern:$0x75316420]
        %473 = vrot.lane.b32.xlu0 %v470, 126
        %v474 = vpop.permute.xlu0 %473
        %475 = vrot.lane.b32.xlu0 %v471, 126
        %v476 = vpop.permute.xlu0 %475
        %477 = vrot.lane.b32.xlu0 %v472, 126
        %v478 = vpop.permute.xlu0 %477
        %vm479 = vcmask 1031168
        %v480 = vsel %vm479, %v474, %v476
        %v481 = vsel %vm479, %v476, %v478
        %v484 = vsel %vm463, %v480, 0.0
        %v485 = vsel %vm464, %v481, 0.0
        %s486 = scalar_lea.vmem [#allocation7], 8
        %v487 = vld [vmem:[%s486] sm:$0xf]
        %v489 = vsel %vm360, %v487, 0
        %v492 = vsel %vm364, %v484, 0
        %v495 = vsel %vm364, %v485, 0
        %497 = vmatpush.msra.mxu0 0.0
        %498 = vmatpush.msra.mxu0 0.0
        %499 = vmatpush.msra.mxu0 0.0
        %500 = vmatpush.msra.mxu0 0.0
        %501 = vmatpush.msra.mxu0 0.0
        %502 = vmatpush.msra.mxu0 0.0
        %503 = vmatpush.msra.mxu0 0.0
        %504 = vmatpush.msra.mxu0 0.0
        %505 = vmatpush.msra.mxu0 0.0
        %506 = vmatpush.msra.mxu0 0.0
        %507 = vmatpush.msra.mxu0 0.0
        %508 = vmatpush.msra.mxu0 0.0
        %509 = vmatpush.msra.mxu0 0.0
        %510 = vmatpush.msra.mxu0 0.0
        %511 = vmatpush.msra.mxu0 0.0
        %512 = vmatpush.msra.mxu0 %v492
        %513 = vmatmul.f32.gmra.mxu0 %v489
        %v514 = vpop.f32.mrf.mxu0
        %v515 = vadd.f32 0.0, %v514
        %516 = vdwg.mxu0
        %517 = vmatpush.msra.mxu0 0.0
        %518 = vmatpush.msra.mxu0 0.0
        %519 = vmatpush.msra.mxu0 0.0
        %520 = vmatpush.msra.mxu0 0.0
        %521 = vmatpush.msra.mxu0 0.0
        %522 = vmatpush.msra.mxu0 0.0
        %523 = vmatpush.msra.mxu0 0.0
        %524 = vmatpush.msra.mxu0 0.0
        %525 = vmatpush.msra.mxu0 0.0
        %526 = vmatpush.msra.mxu0 0.0
        %527 = vmatpush.msra.mxu0 0.0
        %528 = vmatpush.msra.mxu0 0.0
        %529 = vmatpush.msra.mxu0 0.0
        %530 = vmatpush.msra.mxu0 0.0
        %531 = vmatpush.msra.mxu0 0.0
        %532 = vmatpush.msra.mxu0 %v495
        %533 = vmatmul.f32.gmra.mxu0 %v489
        %v534 = vpop.f32.mrf.mxu0
        %v535 = vadd.f32 0.0, %v534
        %536 = vdwg.mxu0
        %v537 = vadd.f32 %v436, %v515
        %v538 = vadd.f32 %v456, %v535
        %v539 = vld [vmem:[#allocation2] sm:$0xff]
        %v540 = vld [vmem:[#allocation2 + $0x8] sm:$0xf]
        %543 = vst [vmem:[#allocation1] ss:$2 sm:$0xff] %v539
        %s544 = scalar_lea.vmem [#allocation1], 16
        %545 = vst [vmem:[%s544] ss:$2 sm:$0xff] %v540
        %v546 = vld.sshfl [vmem:[#allocation1] sm:$0xff pattern:$0x75316420]
        %v547 = vld.sshfl [vmem:[#allocation1 + $0x8] sm:$0xff pattern:$0x75316420]
        %v548 = vld.sshfl [vmem:[#allocation1 + $0x10] sm:$0xff pattern:$0x75316420]
        %549 = vrot.lane.b32.xlu0 %v546, 112
        %v550 = vpop.permute.xlu0 %549
        %551 = vrot.lane.b32.xlu0 %v547, 112
        %v552 = vpop.permute.xlu0 %551
        %553 = vrot.lane.b32.xlu0 %v548, 112
        %v554 = vpop.permute.xlu0 %553
        %vm555 = vcmask 916480
        %v556 = vsel %vm555, %v550, %v552
        %v557 = vsel %vm555, %v552, %v554
        %v560 = vsel %vm328, %v556, 0.0
        %v561 = vsel %vm329, %v557, 0.0
        %s562 = scalar_lea.vmem [#allocation7], 12
        %v563 = vld [vmem:[%s562] sm:$0xf]
        %v565 = vsel %vm360, %v563, 0
        %v568 = vsel %vm364, %v560, 0
        %v571 = vsel %vm364, %v561, 0
        %573 = vmatpush.msra.mxu0 0.0
        %574 = vmatpush.msra.mxu0 0.0
        %575 = vmatpush.msra.mxu0 0.0
        %576 = vmatpush.msra.mxu0 0.0
        %577 = vmatpush.msra.mxu0 0.0
        %578 = vmatpush.msra.mxu0 0.0
        %579 = vmatpush.msra.mxu0 0.0
        %580 = vmatpush.msra.mxu0 0.0
        %581 = vmatpush.msra.mxu0 0.0
        %582 = vmatpush.msra.mxu0 0.0
        %583 = vmatpush.msra.mxu0 0.0
        %584 = vmatpush.msra.mxu0 0.0
        %585 = vmatpush.msra.mxu0 0.0
        %586 = vmatpush.msra.mxu0 0.0
        %587 = vmatpush.msra.mxu0 0.0
        %588 = vmatpush.msra.mxu0 %v568
        %589 = vmatmul.f32.gmra.mxu0 %v565
        %v590 = vpop.f32.mrf.mxu0
        %v591 = vadd.f32 0.0, %v590
        %592 = vdwg.mxu0
        %593 = vmatpush.msra.mxu0 0.0
        %594 = vmatpush.msra.mxu0 0.0
        %595 = vmatpush.msra.mxu0 0.0
        %596 = vmatpush.msra.mxu0 0.0
        %597 = vmatpush.msra.mxu0 0.0
        %598 = vmatpush.msra.mxu0 0.0
        %599 = vmatpush.msra.mxu0 0.0
        %600 = vmatpush.msra.mxu0 0.0
        %601 = vmatpush.msra.mxu0 0.0
        %602 = vmatpush.msra.mxu0 0.0
        %603 = vmatpush.msra.mxu0 0.0
        %604 = vmatpush.msra.mxu0 0.0
        %605 = vmatpush.msra.mxu0 0.0
        %606 = vmatpush.msra.mxu0 0.0
        %607 = vmatpush.msra.mxu0 0.0
        %608 = vmatpush.msra.mxu0 %v571
        %609 = vmatmul.f32.gmra.mxu0 %v565
        %v610 = vpop.f32.mrf.mxu0
        %v611 = vadd.f32 0.0, %v610
        %612 = vdwg.mxu0
        %v613 = vadd.f32 %v537, %v591
        %v614 = vadd.f32 %v538, %v611
        %v615 = vld [vmem:[#allocation2] sm:$0xff]
        %v616 = vld [vmem:[#allocation2 + $0x8] sm:$0xf]
        %s617 = scalar_lea.vmem [#allocation7], 16
        %v618 = vld [vmem:[%s617] sm:$0xf]
        %621 = vst [vmem:[#allocation1] ss:$2 sm:$0xff] %v615
        %s622 = scalar_lea.vmem [#allocation1], 16
        %623 = vst [vmem:[%s622] ss:$2 sm:$0xff] %v616
        %v624 = vld.sshfl [vmem:[#allocation1] sm:$0xff pattern:$0x75316420]
        %v625 = vld.sshfl [vmem:[#allocation1 + $0x8] sm:$0xff pattern:$0x75316420]
        %v626 = vld.sshfl [vmem:[#allocation1 + $0x10] sm:$0xff pattern:$0x75316420]
        %627 = vrot.lane.b32.xlu0 %v624, 111
        %v628 = vpop.permute.xlu0 %627
        %629 = vrot.lane.b32.xlu0 %v625, 111
        %v630 = vpop.permute.xlu0 %629
        %631 = vrot.lane.b32.xlu0 %v626, 111
        %v632 = vpop.permute.xlu0 %631
        %vm633 = vcmask 908288
        %v634 = vsel %vm633, %v628, %v630
        %v635 = vsel %vm633, %v630, %v632
        %v637 = vsel %vm360, %v618, 0
        %v639 = vsel %vm364, %v634, 0
        %v641 = vsel %vm364, %v635, 0
        %643 = vmatpush.msra.mxu0 0.0
        %644 = vmatpush.msra.mxu0 0.0
        %645 = vmatpush.msra.mxu0 0.0
        %646 = vmatpush.msra.mxu0 0.0
        %647 = vmatpush.msra.mxu0 0.0
        %648 = vmatpush.msra.mxu0 0.0
        %649 = vmatpush.msra.mxu0 0.0
        %650 = vmatpush.msra.mxu0 0.0
        %651 = vmatpush.msra.mxu0 0.0
        %652 = vmatpush.msra.mxu0 0.0
        %653 = vmatpush.msra.mxu0 0.0
        %654 = vmatpush.msra.mxu0 0.0
        %655 = vmatpush.msra.mxu0 0.0
        %656 = vmatpush.msra.mxu0 0.0
        %657 = vmatpush.msra.mxu0 0.0
        %658 = vmatpush.msra.mxu0 %v639
        %659 = vmatmul.f32.gmra.mxu0 %v637
        %v660 = vpop.f32.mrf.mxu0
        %v661 = vadd.f32 0.0, %v660
        %662 = vdwg.mxu0
        %663 = vmatpush.msra.mxu0 0.0
        %664 = vmatpush.msra.mxu0 0.0
        %665 = vmatpush.msra.mxu0 0.0
        %666 = vmatpush.msra.mxu0 0.0
        %667 = vmatpush.msra.mxu0 0.0
        %668 = vmatpush.msra.mxu0 0.0
        %669 = vmatpush.msra.mxu0 0.0
        %670 = vmatpush.msra.mxu0 0.0
        %671 = vmatpush.msra.mxu0 0.0
        %672 = vmatpush.msra.mxu0 0.0
        %673 = vmatpush.msra.mxu0 0.0
        %674 = vmatpush.msra.mxu0 0.0
        %675 = vmatpush.msra.mxu0 0.0
        %676 = vmatpush.msra.mxu0 0.0
        %677 = vmatpush.msra.mxu0 0.0
        %678 = vmatpush.msra.mxu0 %v641
        %679 = vmatmul.f32.gmra.mxu0 %v637
        %v680 = vpop.f32.mrf.mxu0
        %v681 = vadd.f32 0.0, %v680
        %682 = vdwg.mxu0
        %v683 = vadd.f32 %v613, %v661
        %v684 = vadd.f32 %v614, %v681
        %v685 = vld [vmem:[#allocation2] sm:$0xff]
        %v686 = vld [vmem:[#allocation2 + $0x8] sm:$0xf]
        %689 = vst [vmem:[#allocation1] ss:$2 sm:$0xff] %v685
        %s690 = scalar_lea.vmem [#allocation1], 16
        %691 = vst [vmem:[%s690] ss:$2 sm:$0xff] %v686
        %v692 = vld.sshfl [vmem:[#allocation1] sm:$0xff pattern:$0x75316420]
        %v693 = vld.sshfl [vmem:[#allocation1 + $0x8] sm:$0xff pattern:$0x75316420]
        %v694 = vld.sshfl [vmem:[#allocation1 + $0x10] sm:$0xff pattern:$0x75316420]
        %695 = vrot.lane.b32.xlu0 %v692, 110
        %v696 = vpop.permute.xlu0 %695
        %697 = vrot.lane.b32.xlu0 %v693, 110
        %v698 = vpop.permute.xlu0 %697
        %699 = vrot.lane.b32.xlu0 %v694, 110
        %v700 = vpop.permute.xlu0 %699
        %vm701 = vcmask 900096
        %v702 = vsel %vm701, %v696, %v698
        %v703 = vsel %vm701, %v698, %v700
        %v706 = vsel %vm463, %v702, 0.0
        %v707 = vsel %vm464, %v703, 0.0
        %s708 = scalar_lea.vmem [#allocation7], 20
        %v709 = vld [vmem:[%s708] sm:$0xf]
        %v711 = vsel %vm360, %v709, 0
        %v714 = vsel %vm364, %v706, 0
        %v717 = vsel %vm364, %v707, 0
        %719 = vmatpush.msra.mxu0 0.0
        %720 = vmatpush.msra.mxu0 0.0
        %721 = vmatpush.msra.mxu0 0.0
        %722 = vmatpush.msra.mxu0 0.0
        %723 = vmatpush.msra.mxu0 0.0
        %724 = vmatpush.msra.mxu0 0.0
        %725 = vmatpush.msra.mxu0 0.0
        %726 = vmatpush.msra.mxu0 0.0
        %727 = vmatpush.msra.mxu0 0.0
        %728 = vmatpush.msra.mxu0 0.0
        %729 = vmatpush.msra.mxu0 0.0
        %730 = vmatpush.msra.mxu0 0.0
        %731 = vmatpush.msra.mxu0 0.0
        %732 = vmatpush.msra.mxu0 0.0
        %733 = vmatpush.msra.mxu0 0.0
        %734 = vmatpush.msra.mxu0 %v714
        %735 = vmatmul.f32.gmra.mxu0 %v711
        %v736 = vpop.f32.mrf.mxu0
        %v737 = vadd.f32 0.0, %v736
        %738 = vdwg.mxu0
        %739 = vmatpush.msra.mxu0 0.0
        %740 = vmatpush.msra.mxu0 0.0
        %741 = vmatpush.msra.mxu0 0.0
        %742 = vmatpush.msra.mxu0 0.0
        %743 = vmatpush.msra.mxu0 0.0
        %744 = vmatpush.msra.mxu0 0.0
        %745 = vmatpush.msra.mxu0 0.0
        %746 = vmatpush.msra.mxu0 0.0
        %747 = vmatpush.msra.mxu0 0.0
        %748 = vmatpush.msra.mxu0 0.0
        %749 = vmatpush.msra.mxu0 0.0
        %750 = vmatpush.msra.mxu0 0.0
        %751 = vmatpush.msra.mxu0 0.0
        %752 = vmatpush.msra.mxu0 0.0
        %753 = vmatpush.msra.mxu0 0.0
        %754 = vmatpush.msra.mxu0 %v717
        %755 = vmatmul.f32.gmra.mxu0 %v711
        %v756 = vpop.f32.mrf.mxu0
        %v757 = vadd.f32 0.0, %v756
        %758 = vdwg.mxu0
        %v759 = vadd.f32 %v683, %v737
        %v760 = vadd.f32 %v684, %v757
        %v761 = vld [vmem:[#allocation2] sm:$0xff]
        %v762 = vld [vmem:[#allocation2 + $0x8] sm:$0xf]
        %765 = vst [vmem:[#allocation1] ss:$2 sm:$0xff] %v761
        %s766 = scalar_lea.vmem [#allocation1], 16
        %767 = vst [vmem:[%s766] ss:$2 sm:$0xff] %v762
        %v768 = vld.sshfl [vmem:[#allocation1] sm:$0xff pattern:$0x75316420]
        %v769 = vld.sshfl [vmem:[#allocation1 + $0x8] sm:$0xff pattern:$0x75316420]
        %v770 = vld.sshfl [vmem:[#allocation1 + $0x10] sm:$0xff pattern:$0x75316420]
        %771 = vrot.lane.b32.xlu0 %v768, 96
        %v772 = vpop.permute.xlu0 %771
        %773 = vrot.lane.b32.xlu0 %v769, 96
        %v774 = vpop.permute.xlu0 %773
        %775 = vrot.lane.b32.xlu0 %v770, 96
        %v776 = vpop.permute.xlu0 %775
        %vm777 = vcmask 785408
        %v778 = vsel %vm777, %v772, %v774
        %v779 = vsel %vm777, %v774, %v776
        %v782 = vsel %vm328, %v778, 0.0
        %v783 = vsel %vm329, %v779, 0.0
        %s784 = scalar_lea.vmem [#allocation7], 24
        %v785 = vld [vmem:[%s784] sm:$0xf]
        %v787 = vsel %vm360, %v785, 0
        %v790 = vsel %vm364, %v782, 0
        %v793 = vsel %vm364, %v783, 0
        %795 = vmatpush.msra.mxu0 0.0
        %796 = vmatpush.msra.mxu0 0.0
        %797 = vmatpush.msra.mxu0 0.0
        %798 = vmatpush.msra.mxu0 0.0
        %799 = vmatpush.msra.mxu0 0.0
        %800 = vmatpush.msra.mxu0 0.0
        %801 = vmatpush.msra.mxu0 0.0
        %802 = vmatpush.msra.mxu0 0.0
        %803 = vmatpush.msra.mxu0 0.0
        %804 = vmatpush.msra.mxu0 0.0
        %805 = vmatpush.msra.mxu0 0.0
        %806 = vmatpush.msra.mxu0 0.0
        %807 = vmatpush.msra.mxu0 0.0
        %808 = vmatpush.msra.mxu0 0.0
        %809 = vmatpush.msra.mxu0 0.0
        %810 = vmatpush.msra.mxu0 %v790
        %811 = vmatmul.f32.gmra.mxu0 %v787
        %v812 = vpop.f32.mrf.mxu0
        %v813 = vadd.f32 0.0, %v812
        %814 = vdwg.mxu0
        %815 = vmatpush.msra.mxu0 0.0
        %816 = vmatpush.msra.mxu0 0.0
        %817 = vmatpush.msra.mxu0 0.0
        %818 = vmatpush.msra.mxu0 0.0
        %819 = vmatpush.msra.mxu0 0.0
        %820 = vmatpush.msra.mxu0 0.0
        %821 = vmatpush.msra.mxu0 0.0
        %822 = vmatpush.msra.mxu0 0.0
        %823 = vmatpush.msra.mxu0 0.0
        %824 = vmatpush.msra.mxu0 0.0
        %825 = vmatpush.msra.mxu0 0.0
        %826 = vmatpush.msra.mxu0 0.0
        %827 = vmatpush.msra.mxu0 0.0
        %828 = vmatpush.msra.mxu0 0.0
        %829 = vmatpush.msra.mxu0 0.0
        %830 = vmatpush.msra.mxu0 %v793
        %831 = vmatmul.f32.gmra.mxu0 %v787
        %v832 = vpop.f32.mrf.mxu0
        %v833 = vadd.f32 0.0, %v832
        %834 = vdwg.mxu0
        %v835 = vadd.f32 %v759, %v813
        %v836 = vadd.f32 %v760, %v833
        %v837 = vld [vmem:[#allocation2] sm:$0xff]
        %v838 = vld [vmem:[#allocation2 + $0x8] sm:$0xf]
        %s839 = scalar_lea.vmem [#allocation7], 28
        %v840 = vld [vmem:[%s839] sm:$0xf]
        %843 = vst [vmem:[#allocation1] ss:$2 sm:$0xff] %v837
        %s844 = scalar_lea.vmem [#allocation1], 16
        %845 = vst [vmem:[%s844] ss:$2 sm:$0xff] %v838
        %v846 = vld.sshfl [vmem:[#allocation1] sm:$0xff pattern:$0x75316420]
        %v847 = vld.sshfl [vmem:[#allocation1 + $0x8] sm:$0xff pattern:$0x75316420]
        %v848 = vld.sshfl [vmem:[#allocation1 + $0x10] sm:$0xff pattern:$0x75316420]
        %849 = vrot.lane.b32.xlu0 %v846, 95
        %v850 = vpop.permute.xlu0 %849
        %851 = vrot.lane.b32.xlu0 %v847, 95
        %v852 = vpop.permute.xlu0 %851
        %853 = vrot.lane.b32.xlu0 %v848, 95
        %v854 = vpop.permute.xlu0 %853
        %vm855 = vcmask 777216
        %v856 = vsel %vm855, %v850, %v852
        %v857 = vsel %vm855, %v852, %v854
        %v859 = vsel %vm360, %v840, 0
        %v861 = vsel %vm364, %v856, 0
        %v863 = vsel %vm364, %v857, 0
        %865 = vmatpush.msra.mxu0 0.0
        %866 = vmatpush.msra.mxu0 0.0
        %867 = vmatpush.msra.mxu0 0.0
        %868 = vmatpush.msra.mxu0 0.0
        %869 = vmatpush.msra.mxu0 0.0
        %870 = vmatpush.msra.mxu0 0.0
        %871 = vmatpush.msra.mxu0 0.0
        %872 = vmatpush.msra.mxu0 0.0
        %873 = vmatpush.msra.mxu0 0.0
        %874 = vmatpush.msra.mxu0 0.0
        %875 = vmatpush.msra.mxu0 0.0
        %876 = vmatpush.msra.mxu0 0.0
        %877 = vmatpush.msra.mxu0 0.0
        %878 = vmatpush.msra.mxu0 0.0
        %879 = vmatpush.msra.mxu0 0.0
        %880 = vmatpush.msra.mxu0 %v861
        %881 = vmatmul.f32.gmra.mxu0 %v859
        %v882 = vpop.f32.mrf.mxu0
        %v883 = vadd.f32 0.0, %v882
        %884 = vdwg.mxu0
        %885 = vmatpush.msra.mxu0 0.0
        %886 = vmatpush.msra.mxu0 0.0
        %887 = vmatpush.msra.mxu0 0.0
        %888 = vmatpush.msra.mxu0 0.0
        %889 = vmatpush.msra.mxu0 0.0
        %890 = vmatpush.msra.mxu0 0.0
        %891 = vmatpush.msra.mxu0 0.0
        %892 = vmatpush.msra.mxu0 0.0
        %893 = vmatpush.msra.mxu0 0.0
        %894 = vmatpush.msra.mxu0 0.0
        %895 = vmatpush.msra.mxu0 0.0
        %896 = vmatpush.msra.mxu0 0.0
        %897 = vmatpush.msra.mxu0 0.0
        %898 = vmatpush.msra.mxu0 0.0
        %899 = vmatpush.msra.mxu0 0.0
        %900 = vmatpush.msra.mxu0 %v863
        %901 = vmatmul.f32.gmra.mxu0 %v859
        %v902 = vpop.f32.mrf.mxu0
        %v903 = vadd.f32 0.0, %v902
        %904 = vdwg.mxu0
        %v905 = vadd.f32 %v835, %v883
        %v906 = vadd.f32 %v836, %v903
        %v907 = vld [vmem:[#allocation2] sm:$0xff]
        %v908 = vld [vmem:[#allocation2 + $0x8] sm:$0xf]
        %911 = vst [vmem:[#allocation1] ss:$2 sm:$0xff] %v907
        %s912 = scalar_lea.vmem [#allocation1], 16
        %913 = vst [vmem:[%s912] ss:$2 sm:$0xff] %v908
        %v914 = vld.sshfl [vmem:[#allocation1] sm:$0xff pattern:$0x75316420]
        %v915 = vld.sshfl [vmem:[#allocation1 + $0x8] sm:$0xff pattern:$0x75316420]
        %v916 = vld.sshfl [vmem:[#allocation1 + $0x10] sm:$0xff pattern:$0x75316420]
        %917 = vrot.lane.b32.xlu0 %v914, 94
        %v918 = vpop.permute.xlu0 %917
        %919 = vrot.lane.b32.xlu0 %v915, 94
        %v920 = vpop.permute.xlu0 %919
        %921 = vrot.lane.b32.xlu0 %v916, 94
        %v922 = vpop.permute.xlu0 %921
        %vm923 = vcmask 769024
        %v924 = vsel %vm923, %v918, %v920
        %v925 = vsel %vm923, %v920, %v922
        %v928 = vsel %vm463, %v924, 0.0
        %v929 = vsel %vm464, %v925, 0.0
        %s930 = scalar_lea.vmem [#allocation7], 32
        %v931 = vld [vmem:[%s930] sm:$0xf]
        %v933 = vsel %vm360, %v931, 0
        %v936 = vsel %vm364, %v928, 0
        %v939 = vsel %vm364, %v929, 0
        %941 = vmatpush.msra.mxu0 0.0
        %942 = vmatpush.msra.mxu0 0.0
        %943 = vmatpush.msra.mxu0 0.0
        %944 = vmatpush.msra.mxu0 0.0
        %945 = vmatpush.msra.mxu0 0.0
        %946 = vmatpush.msra.mxu0 0.0
        %947 = vmatpush.msra.mxu0 0.0
        %948 = vmatpush.msra.mxu0 0.0
        %949 = vmatpush.msra.mxu0 0.0
        %950 = vmatpush.msra.mxu0 0.0
        %951 = vmatpush.msra.mxu0 0.0
        %952 = vmatpush.msra.mxu0 0.0
        %953 = vmatpush.msra.mxu0 0.0
        %954 = vmatpush.msra.mxu0 0.0
        %955 = vmatpush.msra.mxu0 0.0
        %956 = vmatpush.msra.mxu0 %v936
        %957 = vmatmul.f32.gmra.mxu0 %v933
        %v958 = vpop.f32.mrf.mxu0
        %v959 = vadd.f32 0.0, %v958
        %960 = vdwg.mxu0
        %961 = vmatpush.msra.mxu0 0.0
        %962 = vmatpush.msra.mxu0 0.0
        %963 = vmatpush.msra.mxu0 0.0
        %964 = vmatpush.msra.mxu0 0.0
        %965 = vmatpush.msra.mxu0 0.0
        %966 = vmatpush.msra.mxu0 0.0
        %967 = vmatpush.msra.mxu0 0.0
        %968 = vmatpush.msra.mxu0 0.0
        %969 = vmatpush.msra.mxu0 0.0
        %970 = vmatpush.msra.mxu0 0.0
        %971 = vmatpush.msra.mxu0 0.0
        %972 = vmatpush.msra.mxu0 0.0
        %973 = vmatpush.msra.mxu0 0.0
        %974 = vmatpush.msra.mxu0 0.0
        %975 = vmatpush.msra.mxu0 0.0
        %976 = vmatpush.msra.mxu0 %v939
        %977 = vmatmul.f32.gmra.mxu0 %v933
        %v978 = vpop.f32.mrf.mxu0
        %v979 = vadd.f32 0.0, %v978
        %980 = vdwg.mxu0
        %v981 = vadd.f32 %v905, %v959
        %v982 = vadd.f32 %v906, %v979
        %v983 = vld [vmem:[%s3] sm:$0xf]
        %985 = vset.pattern.permute.xlu0 0
        %986 = vperm.xlu0 %985, %v983
        %v987 = vpop.permute.xlu0 %986
        %v989 = vadd.f32 %v981, %v987
        %v990 = vadd.f32 %v982, %v987
        %v991 = vmax.f32 %v989, 0.0
        %v992 = vmax.f32 %v990, 0.0
        %993 = vst.msk [vmem:[#allocation3] sm:$0xf] %vm307, 0.0
        %994 = vst.msk [vmem:[#allocation3 + $0x8] sm:$0xf] %vm309, 0.0
        %v997 = vrot.slane %v992, 4
        %v998 = vsel %vm364, %v991, %v997
        %999 = vrot.lane.b32.xlu0 %v998, 17
        %v1000 = vpop.permute.xlu0 %999
        %v1001 = vrot.slane %v1000, 4
        %v1002 = vsel %vm315, %v1001, %v1000
        %1005 = vst.msk [vmem:[#allocation3] sm:$0xff] %vm321, %v1002
        %1006 = vst.msk [vmem:[#allocation3 + $0x8] sm:$0xf] %vm307, %v1001
        %v1007 = vld [vmem:[#allocation3] sm:$0xff]
        %1009 = vst [vmem:[#allocation1] ss:$2 sm:$0xff] %v1007
        %v1010 = vld.sshfl [vmem:[#allocation1] sm:$0xff pattern:$0x75316420]
        %v1011 = vld.sshfl [vmem:[#allocation1 + $0x8] sm:$0xff pattern:$0x75316420]
        %v1014 = vsel %vm328, %v1010, 0.0
        %v1015 = vsel %vm329, %v1011, 0.0
        %v1016 = vld [vmem:[#allocation9] sm:$0xf]
        %v1017 = vld [vmem:[#allocation3] sm:$0xff]
        %v1018 = vld [vmem:[#allocation3 + $0x8] sm:$0xf]
        %s1019 = scalar_lea.vmem [#allocation9], 4
        %v1020 = vld [vmem:[%s1019] sm:$0xf]
        %1023 = vst [vmem:[#allocation1] ss:$2 sm:$0xff] %v1017
        %s1024 = scalar_lea.vmem [#allocation1], 16
        %1025 = vst [vmem:[%s1024] ss:$2 sm:$0xff] %v1018
        %v1026 = vld.sshfl [vmem:[#allocation1] sm:$0xff pattern:$0x75316420]
        %v1027 = vld.sshfl [vmem:[#allocation1 + $0x8] sm:$0xff pattern:$0x75316420]
        %v1028 = vld.sshfl [vmem:[#allocation1 + $0x10] sm:$0xff pattern:$0x75316420]
        %1029 = vrot.lane.b32.xlu0 %v1026, 127
        %v1030 = vpop.permute.xlu0 %1029
        %1031 = vrot.lane.b32.xlu0 %v1027, 127
        %v1032 = vpop.permute.xlu0 %1031
        %1033 = vrot.lane.b32.xlu0 %v1028, 127
        %v1034 = vpop.permute.xlu0 %1033
        %v1035 = vsel %vm357, %v1030, %v1032
        %v1036 = vsel %vm357, %v1032, %v1034
        %v1038 = vsel %vm360, %v1020, 0
        %v1040 = vsel %vm364, %v1035, 0
        %v1042 = vsel %vm364, %v1036, 0
        %1044 = vmatpush.msra.mxu0 0.0
        %1045 = vmatpush.msra.mxu0 0.0
        %1046 = vmatpush.msra.mxu0 0.0
        %1047 = vmatpush.msra.mxu0 0.0
        %1048 = vmatpush.msra.mxu0 0.0
        %1049 = vmatpush.msra.mxu0 0.0
        %1050 = vmatpush.msra.mxu0 0.0
        %1051 = vmatpush.msra.mxu0 0.0
        %1052 = vmatpush.msra.mxu0 0.0
        %1053 = vmatpush.msra.mxu0 0.0
        %1054 = vmatpush.msra.mxu0 0.0
        %1055 = vmatpush.msra.mxu0 0.0
        %1056 = vmatpush.msra.mxu0 0.0
        %1057 = vmatpush.msra.mxu0 0.0
        %1058 = vmatpush.msra.mxu0 0.0
        %1059 = vmatpush.msra.mxu0 %v1040
        %1060 = vmatmul.f32.gmra.mxu0 %v1038
        %v1061 = vpop.f32.mrf.mxu0
        %v1062 = vadd.f32 0.0, %v1061
        %1063 = vdwg.mxu0
        %1064 = vmatpush.msra.mxu0 0.0
        %1065 = vmatpush.msra.mxu0 0.0
        %1066 = vmatpush.msra.mxu0 0.0
        %1067 = vmatpush.msra.mxu0 0.0
        %1068 = vmatpush.msra.mxu0 0.0
        %1069 = vmatpush.msra.mxu0 0.0
        %1070 = vmatpush.msra.mxu0 0.0
        %1071 = vmatpush.msra.mxu0 0.0
        %1072 = vmatpush.msra.mxu0 0.0
        %1073 = vmatpush.msra.mxu0 0.0
        %1074 = vmatpush.msra.mxu0 0.0
        %1075 = vmatpush.msra.mxu0 0.0
        %1076 = vmatpush.msra.mxu0 0.0
        %1077 = vmatpush.msra.mxu0 0.0
        %1078 = vmatpush.msra.mxu0 0.0
        %1079 = vmatpush.msra.mxu0 %v1042
        %1080 = vmatmul.f32.gmra.mxu0 %v1038
        %v1081 = vpop.f32.mrf.mxu0
        %v1082 = vadd.f32 0.0, %v1081
        %1083 = vdwg.mxu0
        %v1085 = vsel %vm360, %v1016, 0
        %v1088 = vsel %vm364, %v1014, 0
        %v1091 = vsel %vm364, %v1015, 0
        %1093 = vmatpush.msra.mxu0 0.0
        %1094 = vmatpush.msra.mxu0 0.0
        %1095 = vmatpush.msra.mxu0 0.0
        %1096 = vmatpush.msra.mxu0 0.0
        %1097 = vmatpush.msra.mxu0 0.0
        %1098 = vmatpush.msra.mxu0 0.0
        %1099 = vmatpush.msra.mxu0 0.0
        %1100 = vmatpush.msra.mxu0 0.0
        %1101 = vmatpush.msra.mxu0 0.0
        %1102 = vmatpush.msra.mxu0 0.0
        %1103 = vmatpush.msra.mxu0 0.0
        %1104 = vmatpush.msra.mxu0 0.0
        %1105 = vmatpush.msra.mxu0 0.0
        %1106 = vmatpush.msra.mxu0 0.0
        %1107 = vmatpush.msra.mxu0 0.0
        %1108 = vmatpush.msra.mxu0 %v1088
        %1109 = vmatmul.f32.gmra.mxu0 %v1085
        %v1110 = vpop.f32.mrf.mxu0
        %v1111 = vadd.f32 %v1062, %v1110
        %1112 = vdwg.mxu0
        %1113 = vmatpush.msra.mxu0 0.0
        %1114 = vmatpush.msra.mxu0 0.0
        %1115 = vmatpush.msra.mxu0 0.0
        %1116 = vmatpush.msra.mxu0 0.0
        %1117 = vmatpush.msra.mxu0 0.0
        %1118 = vmatpush.msra.mxu0 0.0
        %1119 = vmatpush.msra.mxu0 0.0
        %1120 = vmatpush.msra.mxu0 0.0
        %1121 = vmatpush.msra.mxu0 0.0
        %1122 = vmatpush.msra.mxu0 0.0
        %1123 = vmatpush.msra.mxu0 0.0
        %1124 = vmatpush.msra.mxu0 0.0
        %1125 = vmatpush.msra.mxu0 0.0
        %1126 = vmatpush.msra.mxu0 0.0
        %1127 = vmatpush.msra.mxu0 0.0
        %1128 = vmatpush.msra.mxu0 %v1091
        %1129 = vmatmul.f32.gmra.mxu0 %v1085
        %v1130 = vpop.f32.mrf.mxu0
        %v1131 = vadd.f32 %v1082, %v1130
        %1132 = vdwg.mxu0
        %v1133 = vld [vmem:[#allocation3] sm:$0xff]
        %v1134 = vld [vmem:[#allocation3 + $0x8] sm:$0xf]
        %1137 = vst [vmem:[#allocation1] ss:$2 sm:$0xff] %v1133
        %s1138 = scalar_lea.vmem [#allocation1], 16
        %1139 = vst [vmem:[%s1138] ss:$2 sm:$0xff] %v1134
        %v1140 = vld.sshfl [vmem:[#allocation1] sm:$0xff pattern:$0x75316420]
        %v1141 = vld.sshfl [vmem:[#allocation1 + $0x8] sm:$0xff pattern:$0x75316420]
        %v1142 = vld.sshfl [vmem:[#allocation1 + $0x10] sm:$0xff pattern:$0x75316420]
        %1143 = vrot.lane.b32.xlu0 %v1140, 126
        %v1144 = vpop.permute.xlu0 %1143
        %1145 = vrot.lane.b32.xlu0 %v1141, 126
        %v1146 = vpop.permute.xlu0 %1145
        %1147 = vrot.lane.b32.xlu0 %v1142, 126
        %v1148 = vpop.permute.xlu0 %1147
        %v1149 = vsel %vm479, %v1144, %v1146
        %v1150 = vsel %vm479, %v1146, %v1148
        %v1153 = vsel %vm463, %v1149, 0.0
        %v1154 = vsel %vm464, %v1150, 0.0
        %s1155 = scalar_lea.vmem [#allocation9], 8
        %v1156 = vld [vmem:[%s1155] sm:$0xf]
        %v1158 = vsel %vm360, %v1156, 0
        %v1161 = vsel %vm364, %v1153, 0
        %v1164 = vsel %vm364, %v1154, 0
        %1166 = vmatpush.msra.mxu0 0.0
        %1167 = vmatpush.msra.mxu0 0.0
        %1168 = vmatpush.msra.mxu0 0.0
        %1169 = vmatpush.msra.mxu0 0.0
        %1170 = vmatpush.msra.mxu0 0.0
        %1171 = vmatpush.msra.mxu0 0.0
        %1172 = vmatpush.msra.mxu0 0.0
        %1173 = vmatpush.msra.mxu0 0.0
        %1174 = vmatpush.msra.mxu0 0.0
        %1175 = vmatpush.msra.mxu0 0.0
        %1176 = vmatpush.msra.mxu0 0.0
        %1177 = vmatpush.msra.mxu0 0.0
        %1178 = vmatpush.msra.mxu0 0.0
        %1179 = vmatpush.msra.mxu0 0.0
        %1180 = vmatpush.msra.mxu0 0.0
        %1181 = vmatpush.msra.mxu0 %v1161
        %1182 = vmatmul.f32.gmra.mxu0 %v1158
        %v1183 = vpop.f32.mrf.mxu0
        %v1184 = vadd.f32 0.0, %v1183
        %1185 = vdwg.mxu0
        %1186 = vmatpush.msra.mxu0 0.0
        %1187 = vmatpush.msra.mxu0 0.0
        %1188 = vmatpush.msra.mxu0 0.0
        %1189 = vmatpush.msra.mxu0 0.0
        %1190 = vmatpush.msra.mxu0 0.0
        %1191 = vmatpush.msra.mxu0 0.0
        %1192 = vmatpush.msra.mxu0 0.0
        %1193 = vmatpush.msra.mxu0 0.0
        %1194 = vmatpush.msra.mxu0 0.0
        %1195 = vmatpush.msra.mxu0 0.0
        %1196 = vmatpush.msra.mxu0 0.0
        %1197 = vmatpush.msra.mxu0 0.0
        %1198 = vmatpush.msra.mxu0 0.0
        %1199 = vmatpush.msra.mxu0 0.0
        %1200 = vmatpush.msra.mxu0 0.0
        %1201 = vmatpush.msra.mxu0 %v1164
        %1202 = vmatmul.f32.gmra.mxu0 %v1158
        %v1203 = vpop.f32.mrf.mxu0
        %v1204 = vadd.f32 0.0, %v1203
        %1205 = vdwg.mxu0
        %v1206 = vadd.f32 %v1111, %v1184
        %v1207 = vadd.f32 %v1131, %v1204
        %v1208 = vld [vmem:[#allocation3] sm:$0xff]
        %v1209 = vld [vmem:[#allocation3 + $0x8] sm:$0xf]
        %1212 = vst [vmem:[#allocation1] ss:$2 sm:$0xff] %v1208
        %s1213 = scalar_lea.vmem [#allocation1], 16
        %1214 = vst [vmem:[%s1213] ss:$2 sm:$0xff] %v1209
        %v1215 = vld.sshfl [vmem:[#allocation1] sm:$0xff pattern:$0x75316420]
        %v1216 = vld.sshfl [vmem:[#allocation1 + $0x8] sm:$0xff pattern:$0x75316420]
        %v1217 = vld.sshfl [vmem:[#allocation1 + $0x10] sm:$0xff pattern:$0x75316420]
        %1218 = vrot.lane.b32.xlu0 %v1215, 112
        %v1219 = vpop.permute.xlu0 %1218
        %1220 = vrot.lane.b32.xlu0 %v1216, 112
        %v1221 = vpop.permute.xlu0 %1220
        %1222 = vrot.lane.b32.xlu0 %v1217, 112
        %v1223 = vpop.permute.xlu0 %1222
        %v1224 = vsel %vm555, %v1219, %v1221
        %v1225 = vsel %vm555, %v1221, %v1223
        %v1228 = vsel %vm328, %v1224, 0.0
        %v1229 = vsel %vm329, %v1225, 0.0
        %s1230 = scalar_lea.vmem [#allocation9], 12
        %v1231 = vld [vmem:[%s1230] sm:$0xf]
        %v1233 = vsel %vm360, %v1231, 0
        %v1236 = vsel %vm364, %v1228, 0
        %v1239 = vsel %vm364, %v1229, 0
        %1241 = vmatpush.msra.mxu0 0.0
        %1242 = vmatpush.msra.mxu0 0.0
        %1243 = vmatpush.msra.mxu0 0.0
        %1244 = vmatpush.msra.mxu0 0.0
        %1245 = vmatpush.msra.mxu0 0.0
        %1246 = vmatpush.msra.mxu0 0.0
        %1247 = vmatpush.msra.mxu0 0.0
        %1248 = vmatpush.msra.mxu0 0.0
        %1249 = vmatpush.msra.mxu0 0.0
        %1250 = vmatpush.msra.mxu0 0.0
        %1251 = vmatpush.msra.mxu0 0.0
        %1252 = vmatpush.msra.mxu0 0.0
        %1253 = vmatpush.msra.mxu0 0.0
        %1254 = vmatpush.msra.mxu0 0.0
        %1255 = vmatpush.msra.mxu0 0.0
        %1256 = vmatpush.msra.mxu0 %v1236
        %1257 = vmatmul.f32.gmra.mxu0 %v1233
        %v1258 = vpop.f32.mrf.mxu0
        %v1259 = vadd.f32 0.0, %v1258
        %1260 = vdwg.mxu0
        %1261 = vmatpush.msra.mxu0 0.0
        %1262 = vmatpush.msra.mxu0 0.0
        %1263 = vmatpush.msra.mxu0 0.0
        %1264 = vmatpush.msra.mxu0 0.0
        %1265 = vmatpush.msra.mxu0 0.0
        %1266 = vmatpush.msra.mxu0 0.0
        %1267 = vmatpush.msra.mxu0 0.0
        %1268 = vmatpush.msra.mxu0 0.0
        %1269 = vmatpush.msra.mxu0 0.0
        %1270 = vmatpush.msra.mxu0 0.0
        %1271 = vmatpush.msra.mxu0 0.0
        %1272 = vmatpush.msra.mxu0 0.0
        %1273 = vmatpush.msra.mxu0 0.0
        %1274 = vmatpush.msra.mxu0 0.0
        %1275 = vmatpush.msra.mxu0 0.0
        %1276 = vmatpush.msra.mxu0 %v1239
        %1277 = vmatmul.f32.gmra.mxu0 %v1233
        %v1278 = vpop.f32.mrf.mxu0
        %v1279 = vadd.f32 0.0, %v1278
        %1280 = vdwg.mxu0
        %v1281 = vadd.f32 %v1206, %v1259
        %v1282 = vadd.f32 %v1207, %v1279
        %v1283 = vld [vmem:[#allocation3] sm:$0xff]
        %v1284 = vld [vmem:[#allocation3 + $0x8] sm:$0xf]
        %s1285 = scalar_lea.vmem [#allocation9], 16
        %v1286 = vld [vmem:[%s1285] sm:$0xf]
        %1289 = vst [vmem:[#allocation1] ss:$2 sm:$0xff] %v1283
        %s1290 = scalar_lea.vmem [#allocation1], 16
        %1291 = vst [vmem:[%s1290] ss:$2 sm:$0xff] %v1284
        %v1292 = vld.sshfl [vmem:[#allocation1] sm:$0xff pattern:$0x75316420]
        %v1293 = vld.sshfl [vmem:[#allocation1 + $0x8] sm:$0xff pattern:$0x75316420]
        %v1294 = vld.sshfl [vmem:[#allocation1 + $0x10] sm:$0xff pattern:$0x75316420]
        %1295 = vrot.lane.b32.xlu0 %v1292, 111
        %v1296 = vpop.permute.xlu0 %1295
        %1297 = vrot.lane.b32.xlu0 %v1293, 111
        %v1298 = vpop.permute.xlu0 %1297
        %1299 = vrot.lane.b32.xlu0 %v1294, 111
        %v1300 = vpop.permute.xlu0 %1299
        %v1301 = vsel %vm633, %v1296, %v1298
        %v1302 = vsel %vm633, %v1298, %v1300
        %v1304 = vsel %vm360, %v1286, 0
        %v1306 = vsel %vm364, %v1301, 0
        %v1308 = vsel %vm364, %v1302, 0
        %1310 = vmatpush.msra.mxu0 0.0
        %1311 = vmatpush.msra.mxu0 0.0
        %1312 = vmatpush.msra.mxu0 0.0
        %1313 = vmatpush.msra.mxu0 0.0
        %1314 = vmatpush.msra.mxu0 0.0
        %1315 = vmatpush.msra.mxu0 0.0
        %1316 = vmatpush.msra.mxu0 0.0
        %1317 = vmatpush.msra.mxu0 0.0
        %1318 = vmatpush.msra.mxu0 0.0
        %1319 = vmatpush.msra.mxu0 0.0
        %1320 = vmatpush.msra.mxu0 0.0
        %1321 = vmatpush.msra.mxu0 0.0
        %1322 = vmatpush.msra.mxu0 0.0
        %1323 = vmatpush.msra.mxu0 0.0
        %1324 = vmatpush.msra.mxu0 0.0
        %1325 = vmatpush.msra.mxu0 %v1306
        %1326 = vmatmul.f32.gmra.mxu0 %v1304
        %v1327 = vpop.f32.mrf.mxu0
        %v1328 = vadd.f32 0.0, %v1327
        %1329 = vdwg.mxu0
        %1330 = vmatpush.msra.mxu0 0.0
        %1331 = vmatpush.msra.mxu0 0.0
        %1332 = vmatpush.msra.mxu0 0.0
        %1333 = vmatpush.msra.mxu0 0.0
        %1334 = vmatpush.msra.mxu0 0.0
        %1335 = vmatpush.msra.mxu0 0.0
        %1336 = vmatpush.msra.mxu0 0.0
        %1337 = vmatpush.msra.mxu0 0.0
        %1338 = vmatpush.msra.mxu0 0.0
        %1339 = vmatpush.msra.mxu0 0.0
        %1340 = vmatpush.msra.mxu0 0.0
        %1341 = vmatpush.msra.mxu0 0.0
        %1342 = vmatpush.msra.mxu0 0.0
        %1343 = vmatpush.msra.mxu0 0.0
        %1344 = vmatpush.msra.mxu0 0.0
        %1345 = vmatpush.msra.mxu0 %v1308
        %1346 = vmatmul.f32.gmra.mxu0 %v1304
        %v1347 = vpop.f32.mrf.mxu0
        %v1348 = vadd.f32 0.0, %v1347
        %1349 = vdwg.mxu0
        %v1350 = vadd.f32 %v1281, %v1328
        %v1351 = vadd.f32 %v1282, %v1348
        %v1352 = vld [vmem:[#allocation3] sm:$0xff]
        %v1353 = vld [vmem:[#allocation3 + $0x8] sm:$0xf]
        %1356 = vst [vmem:[#allocation1] ss:$2 sm:$0xff] %v1352
        %s1357 = scalar_lea.vmem [#allocation1], 16
        %1358 = vst [vmem:[%s1357] ss:$2 sm:$0xff] %v1353
        %v1359 = vld.sshfl [vmem:[#allocation1] sm:$0xff pattern:$0x75316420]
        %v1360 = vld.sshfl [vmem:[#allocation1 + $0x8] sm:$0xff pattern:$0x75316420]
        %v1361 = vld.sshfl [vmem:[#allocation1 + $0x10] sm:$0xff pattern:$0x75316420]
        %1362 = vrot.lane.b32.xlu0 %v1359, 110
        %v1363 = vpop.permute.xlu0 %1362
        %1364 = vrot.lane.b32.xlu0 %v1360, 110
        %v1365 = vpop.permute.xlu0 %1364
        %1366 = vrot.lane.b32.xlu0 %v1361, 110
        %v1367 = vpop.permute.xlu0 %1366
        %v1368 = vsel %vm701, %v1363, %v1365
        %v1369 = vsel %vm701, %v1365, %v1367
        %v1372 = vsel %vm463, %v1368, 0.0
        %v1373 = vsel %vm464, %v1369, 0.0
        %s1374 = scalar_lea.vmem [#allocation9], 20
        %v1375 = vld [vmem:[%s1374] sm:$0xf]
        %v1377 = vsel %vm360, %v1375, 0
        %v1380 = vsel %vm364, %v1372, 0
        %v1383 = vsel %vm364, %v1373, 0
        %1385 = vmatpush.msra.mxu0 0.0
        %1386 = vmatpush.msra.mxu0 0.0
        %1387 = vmatpush.msra.mxu0 0.0
        %1388 = vmatpush.msra.mxu0 0.0
        %1389 = vmatpush.msra.mxu0 0.0
        %1390 = vmatpush.msra.mxu0 0.0
        %1391 = vmatpush.msra.mxu0 0.0
        %1392 = vmatpush.msra.mxu0 0.0
        %1393 = vmatpush.msra.mxu0 0.0
        %1394 = vmatpush.msra.mxu0 0.0
        %1395 = vmatpush.msra.mxu0 0.0
        %1396 = vmatpush.msra.mxu0 0.0
        %1397 = vmatpush.msra.mxu0 0.0
        %1398 = vmatpush.msra.mxu0 0.0
        %1399 = vmatpush.msra.mxu0 0.0
        %1400 = vmatpush.msra.mxu0 %v1380
        %1401 = vmatmul.f32.gmra.mxu0 %v1377
        %v1402 = vpop.f32.mrf.mxu0
        %v1403 = vadd.f32 0.0, %v1402
        %1404 = vdwg.mxu0
        %1405 = vmatpush.msra.mxu0 0.0
        %1406 = vmatpush.msra.mxu0 0.0
        %1407 = vmatpush.msra.mxu0 0.0
        %1408 = vmatpush.msra.mxu0 0.0
        %1409 = vmatpush.msra.mxu0 0.0
        %1410 = vmatpush.msra.mxu0 0.0
        %1411 = vmatpush.msra.mxu0 0.0
        %1412 = vmatpush.msra.mxu0 0.0
        %1413 = vmatpush.msra.mxu0 0.0
        %1414 = vmatpush.msra.mxu0 0.0
        %1415 = vmatpush.msra.mxu0 0.0
        %1416 = vmatpush.msra.mxu0 0.0
        %1417 = vmatpush.msra.mxu0 0.0
        %1418 = vmatpush.msra.mxu0 0.0
        %1419 = vmatpush.msra.mxu0 0.0
        %1420 = vmatpush.msra.mxu0 %v1383
        %1421 = vmatmul.f32.gmra.mxu0 %v1377
        %v1422 = vpop.f32.mrf.mxu0
        %v1423 = vadd.f32 0.0, %v1422
        %1424 = vdwg.mxu0
        %v1425 = vadd.f32 %v1350, %v1403
        %v1426 = vadd.f32 %v1351, %v1423
        %v1427 = vld [vmem:[#allocation3] sm:$0xff]
        %v1428 = vld [vmem:[#allocation3 + $0x8] sm:$0xf]
        %1431 = vst [vmem:[#allocation1] ss:$2 sm:$0xff] %v1427
        %s1432 = scalar_lea.vmem [#allocation1], 16
        %1433 = vst [vmem:[%s1432] ss:$2 sm:$0xff] %v1428
        %v1434 = vld.sshfl [vmem:[#allocation1] sm:$0xff pattern:$0x75316420]
        %v1435 = vld.sshfl [vmem:[#allocation1 + $0x8] sm:$0xff pattern:$0x75316420]
        %v1436 = vld.sshfl [vmem:[#allocation1 + $0x10] sm:$0xff pattern:$0x75316420]
        %1437 = vrot.lane.b32.xlu0 %v1434, 96
        %v1438 = vpop.permute.xlu0 %1437
        %1439 = vrot.lane.b32.xlu0 %v1435, 96
        %v1440 = vpop.permute.xlu0 %1439
        %1441 = vrot.lane.b32.xlu0 %v1436, 96
        %v1442 = vpop.permute.xlu0 %1441
        %v1443 = vsel %vm777, %v1438, %v1440
        %v1444 = vsel %vm777, %v1440, %v1442
        %v1447 = vsel %vm328, %v1443, 0.0
        %v1448 = vsel %vm329, %v1444, 0.0
        %s1449 = scalar_lea.vmem [#allocation9], 24
        %v1450 = vld [vmem:[%s1449] sm:$0xf]
        %v1452 = vsel %vm360, %v1450, 0
        %v1455 = vsel %vm364, %v1447, 0
        %v1458 = vsel %vm364, %v1448, 0
        %1460 = vmatpush.msra.mxu0 0.0
        %1461 = vmatpush.msra.mxu0 0.0
        %1462 = vmatpush.msra.mxu0 0.0
        %1463 = vmatpush.msra.mxu0 0.0
        %1464 = vmatpush.msra.mxu0 0.0
        %1465 = vmatpush.msra.mxu0 0.0
        %1466 = vmatpush.msra.mxu0 0.0
        %1467 = vmatpush.msra.mxu0 0.0
        %1468 = vmatpush.msra.mxu0 0.0
        %1469 = vmatpush.msra.mxu0 0.0
        %1470 = vmatpush.msra.mxu0 0.0
        %1471 = vmatpush.msra.mxu0 0.0
        %1472 = vmatpush.msra.mxu0 0.0
        %1473 = vmatpush.msra.mxu0 0.0
        %1474 = vmatpush.msra.mxu0 0.0
        %1475 = vmatpush.msra.mxu0 %v1455
        %1476 = vmatmul.f32.gmra.mxu0 %v1452
        %v1477 = vpop.f32.mrf.mxu0
        %v1478 = vadd.f32 0.0, %v1477
        %1479 = vdwg.mxu0
        %1480 = vmatpush.msra.mxu0 0.0
        %1481 = vmatpush.msra.mxu0 0.0
        %1482 = vmatpush.msra.mxu0 0.0
        %1483 = vmatpush.msra.mxu0 0.0
        %1484 = vmatpush.msra.mxu0 0.0
        %1485 = vmatpush.msra.mxu0 0.0
        %1486 = vmatpush.msra.mxu0 0.0
        %1487 = vmatpush.msra.mxu0 0.0
        %1488 = vmatpush.msra.mxu0 0.0
        %1489 = vmatpush.msra.mxu0 0.0
        %1490 = vmatpush.msra.mxu0 0.0
        %1491 = vmatpush.msra.mxu0 0.0
        %1492 = vmatpush.msra.mxu0 0.0
        %1493 = vmatpush.msra.mxu0 0.0
        %1494 = vmatpush.msra.mxu0 0.0
        %1495 = vmatpush.msra.mxu0 %v1458
        %1496 = vmatmul.f32.gmra.mxu0 %v1452
        %v1497 = vpop.f32.mrf.mxu0
        %v1498 = vadd.f32 0.0, %v1497
        %1499 = vdwg.mxu0
        %v1500 = vadd.f32 %v1425, %v1478
        %v1501 = vadd.f32 %v1426, %v1498
        %v1502 = vld [vmem:[#allocation3] sm:$0xff]
        %v1503 = vld [vmem:[#allocation3 + $0x8] sm:$0xf]
        %s1504 = scalar_lea.vmem [#allocation9], 28
        %v1505 = vld [vmem:[%s1504] sm:$0xf]
        %1508 = vst [vmem:[#allocation1] ss:$2 sm:$0xff] %v1502
        %s1509 = scalar_lea.vmem [#allocation1], 16
        %1510 = vst [vmem:[%s1509] ss:$2 sm:$0xff] %v1503
        %v1511 = vld.sshfl [vmem:[#allocation1] sm:$0xff pattern:$0x75316420]
        %v1512 = vld.sshfl [vmem:[#allocation1 + $0x8] sm:$0xff pattern:$0x75316420]
        %v1513 = vld.sshfl [vmem:[#allocation1 + $0x10] sm:$0xff pattern:$0x75316420]
        %1514 = vrot.lane.b32.xlu0 %v1511, 95
        %v1515 = vpop.permute.xlu0 %1514
        %1516 = vrot.lane.b32.xlu0 %v1512, 95
        %v1517 = vpop.permute.xlu0 %1516
        %1518 = vrot.lane.b32.xlu0 %v1513, 95
        %v1519 = vpop.permute.xlu0 %1518
        %v1520 = vsel %vm855, %v1515, %v1517
        %v1521 = vsel %vm855, %v1517, %v1519
        %v1523 = vsel %vm360, %v1505, 0
        %v1525 = vsel %vm364, %v1520, 0
        %v1527 = vsel %vm364, %v1521, 0
        %1529 = vmatpush.msra.mxu0 0.0
        %1530 = vmatpush.msra.mxu0 0.0
        %1531 = vmatpush.msra.mxu0 0.0
        %1532 = vmatpush.msra.mxu0 0.0
        %1533 = vmatpush.msra.mxu0 0.0
        %1534 = vmatpush.msra.mxu0 0.0
        %1535 = vmatpush.msra.mxu0 0.0
        %1536 = vmatpush.msra.mxu0 0.0
        %1537 = vmatpush.msra.mxu0 0.0
        %1538 = vmatpush.msra.mxu0 0.0
        %1539 = vmatpush.msra.mxu0 0.0
        %1540 = vmatpush.msra.mxu0 0.0
        %1541 = vmatpush.msra.mxu0 0.0
        %1542 = vmatpush.msra.mxu0 0.0
        %1543 = vmatpush.msra.mxu0 0.0
        %1544 = vmatpush.msra.mxu0 %v1525
        %1545 = vmatmul.f32.gmra.mxu0 %v1523
        %v1546 = vpop.f32.mrf.mxu0
        %v1547 = vadd.f32 0.0, %v1546
        %1548 = vdwg.mxu0
        %1549 = vmatpush.msra.mxu0 0.0
        %1550 = vmatpush.msra.mxu0 0.0
        %1551 = vmatpush.msra.mxu0 0.0
        %1552 = vmatpush.msra.mxu0 0.0
        %1553 = vmatpush.msra.mxu0 0.0
        %1554 = vmatpush.msra.mxu0 0.0
        %1555 = vmatpush.msra.mxu0 0.0
        %1556 = vmatpush.msra.mxu0 0.0
        %1557 = vmatpush.msra.mxu0 0.0
        %1558 = vmatpush.msra.mxu0 0.0
        %1559 = vmatpush.msra.mxu0 0.0
        %1560 = vmatpush.msra.mxu0 0.0
        %1561 = vmatpush.msra.mxu0 0.0
        %1562 = vmatpush.msra.mxu0 0.0
        %1563 = vmatpush.msra.mxu0 0.0
        %1564 = vmatpush.msra.mxu0 %v1527
        %1565 = vmatmul.f32.gmra.mxu0 %v1523
        %v1566 = vpop.f32.mrf.mxu0
        %v1567 = vadd.f32 0.0, %v1566
        %1568 = vdwg.mxu0
        %v1569 = vadd.f32 %v1500, %v1547
        %v1570 = vadd.f32 %v1501, %v1567
        %v1571 = vld [vmem:[#allocation3] sm:$0xff]
        %v1572 = vld [vmem:[#allocation3 + $0x8] sm:$0xf]
        %1575 = vst [vmem:[#allocation1] ss:$2 sm:$0xff] %v1571
        %s1576 = scalar_lea.vmem [#allocation1], 16
        %1577 = vst [vmem:[%s1576] ss:$2 sm:$0xff] %v1572
        %v1578 = vld.sshfl [vmem:[#allocation1] sm:$0xff pattern:$0x75316420]
        %v1579 = vld.sshfl [vmem:[#allocation1 + $0x8] sm:$0xff pattern:$0x75316420]
        %v1580 = vld.sshfl [vmem:[#allocation1 + $0x10] sm:$0xff pattern:$0x75316420]
        %1581 = vrot.lane.b32.xlu0 %v1578, 94
        %v1582 = vpop.permute.xlu0 %1581
        %1583 = vrot.lane.b32.xlu0 %v1579, 94
        %v1584 = vpop.permute.xlu0 %1583
        %1585 = vrot.lane.b32.xlu0 %v1580, 94
        %v1586 = vpop.permute.xlu0 %1585
        %v1587 = vsel %vm923, %v1582, %v1584
        %v1588 = vsel %vm923, %v1584, %v1586
        %v1591 = vsel %vm463, %v1587, 0.0
        %v1592 = vsel %vm464, %v1588, 0.0
        %s1593 = scalar_lea.vmem [#allocation9], 32
        %v1594 = vld [vmem:[%s1593] sm:$0xf]
        %v1596 = vsel %vm360, %v1594, 0
        %v1599 = vsel %vm364, %v1591, 0
        %v1602 = vsel %vm364, %v1592, 0
        %1604 = vmatpush.msra.mxu0 0.0
        %1605 = vmatpush.msra.mxu0 0.0
        %1606 = vmatpush.msra.mxu0 0.0
        %1607 = vmatpush.msra.mxu0 0.0
        %1608 = vmatpush.msra.mxu0 0.0
        %1609 = vmatpush.msra.mxu0 0.0
        %1610 = vmatpush.msra.mxu0 0.0
        %1611 = vmatpush.msra.mxu0 0.0
        %1612 = vmatpush.msra.mxu0 0.0
        %1613 = vmatpush.msra.mxu0 0.0
        %1614 = vmatpush.msra.mxu0 0.0
        %1615 = vmatpush.msra.mxu0 0.0
        %1616 = vmatpush.msra.mxu0 0.0
        %1617 = vmatpush.msra.mxu0 0.0
        %1618 = vmatpush.msra.mxu0 0.0
        %1619 = vmatpush.msra.mxu0 %v1599
        %1620 = vmatmul.f32.gmra.mxu0 %v1596
        %v1621 = vpop.f32.mrf.mxu0
        %v1622 = vadd.f32 0.0, %v1621
        %1623 = vdwg.mxu0
        %1624 = vmatpush.msra.mxu0 0.0
        %1625 = vmatpush.msra.mxu0 0.0
        %1626 = vmatpush.msra.mxu0 0.0
        %1627 = vmatpush.msra.mxu0 0.0
        %1628 = vmatpush.msra.mxu0 0.0
        %1629 = vmatpush.msra.mxu0 0.0
        %1630 = vmatpush.msra.mxu0 0.0
        %1631 = vmatpush.msra.mxu0 0.0
        %1632 = vmatpush.msra.mxu0 0.0
        %1633 = vmatpush.msra.mxu0 0.0
        %1634 = vmatpush.msra.mxu0 0.0
        %1635 = vmatpush.msra.mxu0 0.0
        %1636 = vmatpush.msra.mxu0 0.0
        %1637 = vmatpush.msra.mxu0 0.0
        %1638 = vmatpush.msra.mxu0 0.0
        %1639 = vmatpush.msra.mxu0 %v1602
        %1640 = vmatmul.f32.gmra.mxu0 %v1596
        %v1641 = vpop.f32.mrf.mxu0
        %v1642 = vadd.f32 0.0, %v1641
        %1643 = vdwg.mxu0
        %v1644 = vadd.f32 %v1569, %v1622
        %v1645 = vadd.f32 %v1570, %v1642
        %v1646 = vld [vmem:[%s5] sm:$0xf]
        %1648 = vset.pattern.permute.xlu0 0
        %1649 = vperm.xlu0 %1648, %v1646
        %v1650 = vpop.permute.xlu0 %1649
        %v1652 = vadd.f32 %v1644, %v1650
        %v1653 = vadd.f32 %v1645, %v1650
        %1654 = vst [vmem:[#allocation1] ss:$2 sm:$0xff] %v306
        %v1655 = vld.sshfl [vmem:[#allocation1] sm:$0xff pattern:$0x75316420]
        %v1656 = vld.sshfl [vmem:[#allocation1 + $0x8] sm:$0xff pattern:$0x75316420]
        %v1659 = vadd.f32 %v1652, %v1655
        %v1660 = vadd.f32 %v1653, %v1656
        %v1661 = vmax.f32 %v1659, 0.0
        %v1662 = vmax.f32 %v1660, 0.0
        %v1665 = vrot.slane %v1662, 4
        %v1666 = vsel %vm364, %v1661, %v1665
        %1668 = vst [vmem:[%s302] sm:$0xff] %v1666
        %s1669 = sand.u32 %s163, 1
        %s1670 = scalar_lea.sflag [#allocation6], %s1669
        %s1671 = sand.u32 %s163, 1
        %s1672 = smul.addr %s1671, 8
        %s1673 = scalar_lea.vmem [#allocation10], %s1672
        // Predicated region
        $region57: #{tpu_custom_call.1} parent=43 // pred_check
          %p1674 = pneg %p173
        $region58: #{tpu_custom_call.1} parent=43 // pred_check_branch
          %1676 = sbr.rel (%p1674) target = $region60
        $region59: #{tpu_custom_call.1} parent=43 // pred_region
          %1678 = vsyncadd %s1670, 0
          %s1679 = smul.addr %s24, 2
          %s1680 = smul.addr %s1679, 4
          %s1681 = scalar_lea.hbm %s6, %s1680
          %s1683 = sshll.u32 %s1673, 4
          %s1684 = int_to_ptr.vmem [resolvable:$true] %s1683
          %s1685 = sshll.u32 %s1681, 4
          %s1686 = int_to_ptr.hbm [resolvable:$true] %s1685
          %1688 = dma.vmem_to_hbm [thread:$0]  %s1684, 128, %s1686, %s1670
        $region60: #{tpu_custom_call.1} parent=43 // pred_fallthru
          _
      $region44: #{tpu_custom_call.1} parent=5 // pred_fallthru
        _
      %p1689 = scmp.le.s32.totalorder 2, %s19
      // Predicated region
      $region61: #{tpu_custom_call.1} parent=5 // pred_check
        %p1690 = pneg %p1689
      $region62: #{tpu_custom_call.1} parent=5 // pred_check_branch
        %1692 = sbr.rel (%p1690) target = $region64
      $region63: #{tpu_custom_call.1} parent=5 // pred_region
        %s1693 = ssub.s32 %s19, 2
        // Predicated region
        $region65: #{tpu_custom_call.1} parent=63 // pred_check
          %p1694 = pneg %p179
        $region66: #{tpu_custom_call.1} parent=63 // pred_check_branch
          %1696 = sbr.rel (%p1694) target = $region68
        $region67: #{tpu_custom_call.1} parent=63 // pred_region
          %s1697 = sand.u32 %s164, 1
          %s1698 = scalar_lea.sflag [#allocation6], %s1697
          %s1699 = sand.u32 %s164, 1
          %s1700 = smul.addr %s1699, 8
          %s1701 = scalar_lea.vmem [#allocation10], %s1700
          %1703 = dma.done %s1698, 128
        $region68: #{tpu_custom_call.1} parent=63 // pred_fallthru
          _
      $region64: #{tpu_custom_call.1} parent=5 // pred_fallthru
        _
    $region6: #{tpu_custom_call.1} parent=1 // loop_footer
      %s23 = sadd.s32 1, %s19
    $region7: #{tpu_custom_call.1} parent=1 // loop_footer_branch
      %18 = sbr.rel target = $region3
    $region8: #{tpu_custom_call.1} parent=1 // loop_exit
      _
    %1704 = vsyncpa [#allocation5], 1
    %s1705 = scalar_lea.sflag [#allocation5], 1
    %1706 = vsyncpa %s1705, 1
    %1707 = vsyncpa [#allocation8], 1
    %1708 = vsyncpa [#allocation6], 1
    %s1709 = scalar_lea.sflag [#allocation6], 1
    %1710 = vsyncpa %s1709, 1

</llo_original>
